<compile_context>
chip_gen: v7x
topology: tpu7x:2x2x1
jax: 0.10.0
libtpu: 0.0.40
codegen_flags: <defaults>
</compile_context>

<pallas_src>
import jax
import jax.numpy as jnp
from jax.experimental import pallas as pl
from jax.experimental.pallas import tpu as pltpu

BN_EPS = 1e-5  # PyTorch BatchNorm2d default


def _round_up(x, m):
    return (x + m - 1) // m * m


# ----------------------------------------------------------------------------
# Kernel 1: conv-as-GEMM with folded BN + ReLU, gridded over M (patch rows)
# ----------------------------------------------------------------------------
def _conv_gemm_kernel(x_ref, w_ref, shift_ref, o_ref):
    acc = jnp.dot(x_ref[...], w_ref[...], preferred_element_type=jnp.float32)
    o_ref[...] = jnp.maximum(acc + shift_ref[...], 0.0).astype(o_ref.dtype)


def conv_gemm_bn_relu(patches, w, shift, *, tile_m=512):
    """relu(patches @ w + shift); bf16 operands, f32 accumulate, bf16 out."""
    M, K = patches.shape
    N = w.shape[1]
    tm = max(8, _round_up(M, 8)) if M <= tile_m else tile_m
    grid_m = pl.cdiv(M, tm)
    Mp = grid_m * tm
    if Mp != M:
        patches = jnp.pad(patches, ((0, Mp - M), (0, 0)))
    out = pl.pallas_call(
        _conv_gemm_kernel,
        out_shape=jax.ShapeDtypeStruct((Mp, N), jnp.bfloat16),
        grid=(grid_m,),
        in_specs=[
            pl.BlockSpec((tm, K), lambda i: (i, 0)),   # patch rows, tiled
            pl.BlockSpec((K, N), lambda i: (0, 0)),    # full weight
            pl.BlockSpec((1, N), lambda i: (0, 0)),    # per-channel shift
        ],
        out_specs=pl.BlockSpec((tm, N), lambda i: (i, 0)),
        compiler_params=pltpu.CompilerParams(
            dimension_semantics=("parallel",)),
    )(patches, w, shift)
    return out[:M]


# ----------------------------------------------------------------------------
# Kernel 2: conv2 GEMM + BN + ReLU + global avg-pool + fc1 + ReLU + fc2
# (one fused kernel, gridded over batch)
# ----------------------------------------------------------------------------
def _conv2_head_kernel(p_ref, w2_ref, sh2_ref, fc1w_ref, fc1b_ref,
                       fc2w_ref, fc2b_ref, o_ref):
    # conv2 as GEMM (bf16 x bf16 -> f32) with folded BN, then ReLU.
    h = jnp.dot(p_ref[0], w2_ref[...], preferred_element_type=jnp.float32)
    h = jnp.maximum(h + sh2_ref[...], 0.0)            # (25, 128)
    # AdaptiveAvgPool2d((1, 1)) == mean over the 25 spatial positions.
    pooled = jnp.mean(h, axis=0, keepdims=True)       # (1, 128)
    # fc1 + ReLU (tiny, kept in f32).
    f1 = jnp.dot(pooled, fc1w_ref[...], preferred_element_type=jnp.float32)
    f1 = jnp.maximum(f1 + fc1b_ref[...], 0.0)         # (1, 84)
    # fc2 (logits).
    logits = jnp.dot(f1, fc2w_ref[...], preferred_element_type=jnp.float32)
    o_ref[0] = logits + fc2b_ref[...]                 # (1, num_classes)


def conv2_pool_fc_head(patches2, w2, shift2, fc1_w, fc1_b, fc2_w, fc2_b):
    B, P, K = patches2.shape          # (B, 25, 800)
    N = w2.shape[1]                   # 128
    Hf = fc1_w.shape[1]               # 84
    C = fc2_w.shape[1]                # num_classes
    out = pl.pallas_call(
        _conv2_head_kernel,
        out_shape=jax.ShapeDtypeStruct((B, 1, C), jnp.float32),
        grid=(B,),
        in_specs=[
            pl.BlockSpec((1, P, K), lambda b: (b, 0, 0)),  # per-sample patches
            pl.BlockSpec((K, N), lambda b: (0, 0)),        # conv2 weight
            pl.BlockSpec((1, N), lambda b: (0, 0)),        # conv2 shift
            pl.BlockSpec((N, Hf), lambda b: (0, 0)),       # fc1 weight
            pl.BlockSpec((1, Hf), lambda b: (0, 0)),       # fc1 bias
            pl.BlockSpec((Hf, C), lambda b: (0, 0)),       # fc2 weight
            pl.BlockSpec((1, C), lambda b: (0, 0)),        # fc2 bias
        ],
        out_specs=pl.BlockSpec((1, 1, C), lambda b: (b, 0, 0)),
        compiler_params=pltpu.CompilerParams(
            dimension_semantics=("parallel",)),
    )(patches2, w2, shift2, fc1_w, fc1_b, fc2_w, fc2_b)
    return out.reshape(B, C)


# ----------------------------------------------------------------------------
# JAX glue: im2col, BN folding, parameter setup, forward
# ----------------------------------------------------------------------------
def im2col(x_nhwc, k, stride):
    """Extract (kh, kw, Cin)-ordered patches -> (B*Ho*Wo, k*k*Cin)."""
    B, H, W, C = x_nhwc.shape
    Ho = (H - k) // stride + 1
    Wo = (W - k) // stride + 1
    cols = []
    for di in range(k):
        for dj in range(k):
            cols.append(x_nhwc[:, di:di + stride * (Ho - 1) + 1:stride,
                               dj:dj + stride * (Wo - 1) + 1:stride, :])
    patches = jnp.stack(cols, axis=3)           # (B, Ho, Wo, k*k, C)
    return patches.reshape(B * Ho * Wo, k * k * C), Ho, Wo


def conv_weight_to_gemm(w_oihw):
    """PyTorch conv weight (Cout, Cin, kh, kw) -> GEMM weight (kh*kw*Cin, Cout)."""
    Cout, Cin, kh, kw = w_oihw.shape
    return jnp.transpose(w_oihw, (2, 3, 1, 0)).reshape(kh * kw * Cin, Cout)


def fold_bn(conv_bias, gamma, beta, mean, var):
    """Fold conv bias + eval-mode BatchNorm into per-channel (scale, shift)."""
    s = gamma / jnp.sqrt(var + BN_EPS)
    return s, (conv_bias - mean) * s + beta


def init_params(key, num_classes=10):
    ks = jax.random.split(key, 12)

    def u(k, shape, fan_in):
        bound = 1.0 / jnp.sqrt(float(fan_in))
        return jax.random.uniform(k, shape, jnp.float32, -bound, bound)

    p = {
        # conv1: Conv2d(3, 32, 5, stride=2)
        "conv1_w": u(ks[0], (32, 3, 5, 5), 3 * 5 * 5),
        "conv1_b": u(ks[1], (32,), 3 * 5 * 5),
        "bn1_gamma": 1.0 + 0.1 * jax.random.normal(ks[2], (32,), jnp.float32),
        "bn1_beta": 0.1 * jax.random.normal(ks[3], (32,), jnp.float32),
        "bn1_mean": 0.1 * jax.random.normal(ks[4], (32,), jnp.float32),
        "bn1_var": 1.0 + jnp.abs(0.1 * jax.random.normal(ks[5], (32,), jnp.float32)),
        # conv2: Conv2d(32, 128, 5, stride=2)
        "conv2_w": u(ks[6], (128, 32, 5, 5), 32 * 5 * 5),
        "conv2_b": u(ks[7], (128,), 32 * 5 * 5),
        "bn2_gamma": 1.0 + 0.1 * jax.random.normal(ks[8], (128,), jnp.float32),
        "bn2_beta": 0.1 * jax.random.normal(ks[9], (128,), jnp.float32),
        "bn2_mean": 0.1 * jax.random.normal(ks[10], (128,), jnp.float32),
        "bn2_var": 1.0 + jnp.abs(0.1 * jax.random.normal(ks[11], (128,), jnp.float32)),
        # fc1: Linear(128, 84); fc2: Linear(84, num_classes). Torch weight = (out, in).
        "fc1_w": u(jax.random.fold_in(key, 100), (84, 128), 128),
        "fc1_b": u(jax.random.fold_in(key, 101), (84,), 128),
        "fc2_w": u(jax.random.fold_in(key, 102), (num_classes, 84), 84),
        "fc2_b": u(jax.random.fold_in(key, 103), (num_classes,), 84),
    }
    return p


def snet_cifar_forward(x_nchw, p):
    # NOTE: BatchNorm is implemented in inference mode (running statistics),
    # folded into the GEMM weights + per-channel shift.
    B = x_nchw.shape[0]
    x = jnp.transpose(x_nchw, (0, 2, 3, 1)).astype(jnp.float32)  # NCHW -> NHWC

    # ---- conv1 (3->32, k=5, s=2) + bn1 + relu ----
    patches1, Ho1, Wo1 = im2col(x, 5, 2)                     # (B*196, 75)
    s1, sh1 = fold_bn(p["conv1_b"], p["bn1_gamma"], p["bn1_beta"],
                      p["bn1_mean"], p["bn1_var"])
    w1 = conv_weight_to_gemm(p["conv1_w"]) * s1[None, :]     # (75, 32)
    # Pad Cout 32 -> 128 so the output store is lane-dense / full MXU tile.
    w1p = jnp.pad(w1, ((0, 0), (0, 96))).astype(jnp.bfloat16)
    sh1p = jnp.pad(sh1, (0, 96)).reshape(1, 128).astype(jnp.float32)
    y1p = conv_gemm_bn_relu(patches1.astype(jnp.bfloat16), w1p, sh1p)
    y1 = y1p[:, :32].reshape(B, Ho1, Wo1, 32)                # bf16

    # ---- conv2 (32->128, k=5, s=2) + bn2 + relu + avgpool + fc1 + fc2 ----
    patches2, Ho2, Wo2 = im2col(y1, 5, 2)                    # (B*25, 800) bf16
    patches2 = patches2.reshape(B, Ho2 * Wo2, 5 * 5 * 32)    # (B, 25, 800)
    s2, sh2 = fold_bn(p["conv2_b"], p["bn2_gamma"], p["bn2_beta"],
                      p["bn2_mean"], p["bn2_var"])
    w2 = (conv_weight_to_gemm(p["conv2_w"]) * s2[None, :]).astype(jnp.bfloat16)
    sh2 = sh2.reshape(1, 128).astype(jnp.float32)
    fc1_w = p["fc1_w"].T.astype(jnp.float32)                 # (128, 84)
    fc1_b = p["fc1_b"].reshape(1, -1).astype(jnp.float32)
    fc2_w = p["fc2_w"].T.astype(jnp.float32)                 # (84, num_classes)
    fc2_b = p["fc2_b"].reshape(1, -1).astype(jnp.float32)

    return conv2_pool_fc_head(patches2, w2, sh2, fc1_w, fc1_b, fc2_w, fc2_b)


if __name__ == "__main__":
    key = jax.random.PRNGKey(0)
    k_param, k_input = jax.random.split(key)

    params = init_params(k_param, num_classes=10)
    # CIFAR-shaped input: batch=2, 3 channels, 32x32 spatial (NCHW, like PyTorch).
    x = jax.random.normal(k_input, (2, 3, 32, 32), jnp.float32)

    logits = jax.jit(snet_cifar_forward)(x, params)
    jax.block_until_ready(logits)

    assert logits.shape == (2, 10), logits.shape
    assert logits.dtype == jnp.float32
    print("KERNEL_OK")
</pallas_src>

<mosaic_0001>
module attributes {stable_mosaic.version = 11 : i64} {
  func.func @_conv_gemm_kernel(%arg0: i32, %arg1: memref<392x75xbf16, #tpu.memory_space<vmem>>, %arg2: memref<75x128xbf16, #tpu.memory_space<vmem>>, %arg3: memref<1x128xf32, #tpu.memory_space<vmem>>, %arg4: memref<392x128xbf16, #tpu.memory_space<vmem>>) attributes {dimension_semantics = [#tpu.dimension_semantics<parallel>], iteration_bounds = array<i64: 1>, scalar_prefetch = 0 : i64, scratch_operands = 0 : i64, tpu.core_type = #tpu.core_type<tc>, window_params = [{transform_indices = @transform_0, window_bounds = array<i64: 392, 75>}, {pipeline_mode = #tpu.pipeline_mode<synchronous>, transform_indices = @transform_1, window_bounds = array<i64: 75, 128>}, {pipeline_mode = #tpu.pipeline_mode<synchronous>, transform_indices = @transform_2, window_bounds = array<i64: 1, 128>}, {transform_indices = @transform_3, window_bounds = array<i64: 392, 128>}]} {
    %c0 = arith.constant 0 : index
    %c0_0 = arith.constant 0 : index
    %0 = vector.load %arg1[%c0, %c0_0] : memref<392x75xbf16, #tpu.memory_space<vmem>>, vector<392x75xbf16>
    %c0_1 = arith.constant 0 : index
    %c0_2 = arith.constant 0 : index
    %1 = vector.load %arg2[%c0_1, %c0_2] : memref<75x128xbf16, #tpu.memory_space<vmem>>, vector<75x128xbf16>
    %cst = arith.constant dense<0.000000e+00> : vector<392x128xf32>
    %2 = tpu.matmul %0, %1, %cst {dimension_numbers = #tpu.dot_dimension_numbers<[1], [0], [0], [1], [0, 0, 1, 1], [], []>} : vector<392x75xbf16>, vector<75x128xbf16>, vector<392x128xf32> -> vector<392x128xf32>
    %c0_3 = arith.constant 0 : index
    %c0_4 = arith.constant 0 : index
    %3 = vector.load %arg3[%c0_3, %c0_4] : memref<1x128xf32, #tpu.memory_space<vmem>>, vector<1x128xf32>
    %4 = vector.broadcast %3 : vector<1x128xf32> to vector<392x128xf32>
    %5 = arith.addf %2, %4 : vector<392x128xf32>
    %cst_5 = arith.constant 0.000000e+00 : f32
    %6 = vector.broadcast %cst_5 : f32 to vector<392x128xf32>
    %7 = arith.maximumf %5, %6 : vector<392x128xf32>
    %8 = arith.truncf %7 : vector<392x128xf32> to vector<392x128xbf16>
    %c0_6 = arith.constant 0 : index
    %c0_7 = arith.constant 0 : index
    %9 = vector.load %arg4[%c0_6, %c0_7] : memref<392x128xbf16, #tpu.memory_space<vmem>>, vector<392x128xbf16>
    tpu.vector_store %arg4[%c0_6, %c0_7], %8 {strides = array<i32>} : memref<392x128xbf16, #tpu.memory_space<vmem>>, vector<392x128xbf16>,
    return
  }
  func.func @transform_0(%arg0: i32) -> (i32, i32) {
    %c0_i32 = arith.constant 0 : i32
    %c0_i32_0 = arith.constant 0 : i32
    return %arg0, %c0_i32 : i32, i32
  }
  func.func @transform_1(%arg0: i32) -> (i32, i32) {
    %c0_i32 = arith.constant 0 : i32
    %c0_i32_0 = arith.constant 0 : i32
    %c0_i32_1 = arith.constant 0 : i32
    return %c0_i32, %c0_i32_0 : i32, i32
  }
  func.func @transform_2(%arg0: i32) -> (i32, i32) {
    %c0_i32 = arith.constant 0 : i32
    %c0_i32_0 = arith.constant 0 : i32
    %c0_i32_1 = arith.constant 0 : i32
    return %c0_i32, %c0_i32_0 : i32, i32
  }
  func.func @transform_3(%arg0: i32) -> (i32, i32) {
    %c0_i32 = arith.constant 0 : i32
    %c0_i32_0 = arith.constant 0 : i32
    return %arg0, %c0_i32 : i32, i32
  }
}

module attributes {stable_mosaic.version = 11 : i64} {
  func.func @_conv2_head_kernel(%arg0: i32, %arg1: memref<1x25x800xbf16, #tpu.memory_space<vmem>>, %arg2: memref<800x128xbf16, #tpu.memory_space<vmem>>, %arg3: memref<1x128xf32, #tpu.memory_space<vmem>>, %arg4: memref<128x84xf32, #tpu.memory_space<vmem>>, %arg5: memref<1x84xf32, #tpu.memory_space<vmem>>, %arg6: memref<84x10xf32, #tpu.memory_space<vmem>>, %arg7: memref<1x10xf32, #tpu.memory_space<vmem>>, %arg8: memref<1x1x10xf32, #tpu.memory_space<vmem>>) attributes {dimension_semantics = [#tpu.dimension_semantics<parallel>], iteration_bounds = array<i64: 2>, scalar_prefetch = 0 : i64, scratch_operands = 0 : i64, tpu.core_type = #tpu.core_type<tc>, window_params = [{transform_indices = @transform_0, window_bounds = array<i64: 1, 25, 800>}, {pipeline_mode = #tpu.pipeline_mode<synchronous>, transform_indices = @transform_1, window_bounds = array<i64: 800, 128>}, {pipeline_mode = #tpu.pipeline_mode<synchronous>, transform_indices = @transform_2, window_bounds = array<i64: 1, 128>}, {pipeline_mode = #tpu.pipeline_mode<synchronous>, transform_indices = @transform_3, window_bounds = array<i64: 128, 84>}, {pipeline_mode = #tpu.pipeline_mode<synchronous>, transform_indices = @transform_4, window_bounds = array<i64: 1, 84>}, {pipeline_mode = #tpu.pipeline_mode<synchronous>, transform_indices = @transform_5, window_bounds = array<i64: 84, 10>}, {pipeline_mode = #tpu.pipeline_mode<synchronous>, transform_indices = @transform_6, window_bounds = array<i64: 1, 10>}, {transform_indices = @transform_7, window_bounds = array<i64: 1, 1, 10>}]} {
    %c0 = arith.constant 0 : index
    %c0_0 = arith.constant 0 : index
    %c0_1 = arith.constant 0 : index
    %0 = vector.load %arg1[%c0, %c0_0, %c0_1] : memref<1x25x800xbf16, #tpu.memory_space<vmem>>, vector<1x25x800xbf16>
    %1 = vector.shape_cast %0 : vector<1x25x800xbf16> to vector<25x800xbf16>
    %c0_2 = arith.constant 0 : index
    %c0_3 = arith.constant 0 : index
    %2 = vector.load %arg2[%c0_2, %c0_3] : memref<800x128xbf16, #tpu.memory_space<vmem>>, vector<800x128xbf16>
    %cst = arith.constant dense<0.000000e+00> : vector<25x128xf32>
    %3 = tpu.matmul %1, %2, %cst {dimension_numbers = #tpu.dot_dimension_numbers<[1], [0], [0], [1], [0, 0, 1, 1], [], []>} : vector<25x800xbf16>, vector<800x128xbf16>, vector<25x128xf32> -> vector<25x128xf32>
    %c0_4 = arith.constant 0 : index
    %c0_5 = arith.constant 0 : index
    %4 = vector.load %arg3[%c0_4, %c0_5] : memref<1x128xf32, #tpu.memory_space<vmem>>, vector<1x128xf32>
    %5 = vector.broadcast %4 : vector<1x128xf32> to vector<25x128xf32>
    %6 = arith.addf %3, %5 : vector<25x128xf32>
    %cst_6 = arith.constant 0.000000e+00 : f32
    %7 = vector.broadcast %cst_6 : f32 to vector<25x128xf32>
    %8 = arith.maximumf %6, %7 : vector<25x128xf32>
    %cst_7 = arith.constant dense<0.000000e+00> : vector<128xf32>
    %9 = vector.multi_reduction <add>, %8, %cst_7 [0] : vector<25x128xf32> to vector<128xf32>
    %10 = vector.shape_cast %9 : vector<128xf32> to vector<1x128xf32>
    %cst_8 = arith.constant 2.500000e+01 : f32
    %11 = vector.broadcast %cst_8 : f32 to vector<1x128xf32>
    %12 = arith.divf %10, %11 : vector<1x128xf32>
    %c0_9 = arith.constant 0 : index
    %c0_10 = arith.constant 0 : index
    %13 = vector.load %arg4[%c0_9, %c0_10] : memref<128x84xf32, #tpu.memory_space<vmem>>, vector<128x84xf32>
    %cst_11 = arith.constant dense<0.000000e+00> : vector<1x84xf32>
    %14 = tpu.matmul %12, %13, %cst_11 {dimension_numbers = #tpu.dot_dimension_numbers<[1], [0], [0], [1], [0, 0, 1, 1], [], []>} : vector<1x128xf32>, vector<128x84xf32>, vector<1x84xf32> -> vector<1x84xf32>
    %c0_12 = arith.constant 0 : index
    %c0_13 = arith.constant 0 : index
    %15 = vector.load %arg5[%c0_12, %c0_13] : memref<1x84xf32, #tpu.memory_space<vmem>>, vector<1x84xf32>
    %16 = arith.addf %14, %15 : vector<1x84xf32>
    %cst_14 = arith.constant 0.000000e+00 : f32
    %17 = vector.broadcast %cst_14 : f32 to vector<1x84xf32>
    %18 = arith.maximumf %16, %17 : vector<1x84xf32>
    %c0_15 = arith.constant 0 : index
    %c0_16 = arith.constant 0 : index
    %19 = vector.load %arg6[%c0_15, %c0_16] : memref<84x10xf32, #tpu.memory_space<vmem>>, vector<84x10xf32>
    %cst_17 = arith.constant dense<0.000000e+00> : vector<1x10xf32>
    %20 = tpu.matmul %18, %19, %cst_17 {dimension_numbers = #tpu.dot_dimension_numbers<[1], [0], [0], [1], [0, 0, 1, 1], [], []>} : vector<1x84xf32>, vector<84x10xf32>, vector<1x10xf32> -> vector<1x10xf32>
    %c0_18 = arith.constant 0 : index
    %c0_19 = arith.constant 0 : index
    %21 = vector.load %arg7[%c0_18, %c0_19] : memref<1x10xf32, #tpu.memory_space<vmem>>, vector<1x10xf32>
    %22 = arith.addf %20, %21 : vector<1x10xf32>
    %c0_20 = arith.constant 0 : index
    %c0_21 = arith.constant 0 : index
    %c0_22 = arith.constant 0 : index
    %23 = vector.load %arg8[%c0_20, %c0_21, %c0_22] : memref<1x1x10xf32, #tpu.memory_space<vmem>>, vector<1x1x10xf32>
    %24 = vector.shape_cast %23 : vector<1x1x10xf32> to vector<1x10xf32>
    %25 = vector.shape_cast %22 : vector<1x10xf32> to vector<1x1x10xf32>
    tpu.vector_store %arg8[%c0_20, %c0_21, %c0_22], %25 {strides = array<i32>} : memref<1x1x10xf32, #tpu.memory_space<vmem>>, vector<1x1x10xf32>,
    return
  }
  func.func @transform_0(%arg0: i32) -> (i32, i32, i32) {
    %c0_i32 = arith.constant 0 : i32
    %c0_i32_0 = arith.constant 0 : i32
    %c0_i32_1 = arith.constant 0 : i32
    return %arg0, %c0_i32, %c0_i32_0 : i32, i32, i32
  }
  func.func @transform_1(%arg0: i32) -> (i32, i32) {
    %c0_i32 = arith.constant 0 : i32
    %c0_i32_0 = arith.constant 0 : i32
    %c0_i32_1 = arith.constant 0 : i32
    return %c0_i32, %c0_i32_0 : i32, i32
  }
  func.func @transform_2(%arg0: i32) -> (i32, i32) {
    %c0_i32 = arith.constant 0 : i32
    %c0_i32_0 = arith.constant 0 : i32
    %c0_i32_1 = arith.constant 0 : i32
    return %c0_i32, %c0_i32_0 : i32, i32
  }
  func.func @transform_3(%arg0: i32) -> (i32, i32) {
    %c0_i32 = arith.constant 0 : i32
    %c0_i32_0 = arith.constant 0 : i32
    %c0_i32_1 = arith.constant 0 : i32
    return %c0_i32, %c0_i32_0 : i32, i32
  }
  func.func @transform_4(%arg0: i32) -> (i32, i32) {
    %c0_i32 = arith.constant 0 : i32
    %c0_i32_0 = arith.constant 0 : i32
    %c0_i32_1 = arith.constant 0 : i32
    return %c0_i32, %c0_i32_0 : i32, i32
  }
  func.func @transform_5(%arg0: i32) -> (i32, i32) {
    %c0_i32 = arith.constant 0 : i32
    %c0_i32_0 = arith.constant 0 : i32
    %c0_i32_1 = arith.constant 0 : i32
    return %c0_i32, %c0_i32_0 : i32, i32
  }
  func.func @transform_6(%arg0: i32) -> (i32, i32) {
    %c0_i32 = arith.constant 0 : i32
    %c0_i32_0 = arith.constant 0 : i32
    %c0_i32_1 = arith.constant 0 : i32
    return %c0_i32, %c0_i32_0 : i32, i32
  }
  func.func @transform_7(%arg0: i32) -> (i32, i32, i32) {
    %c0_i32 = arith.constant 0 : i32
    %c0_i32_0 = arith.constant 0 : i32
    %c0_i32_1 = arith.constant 0 : i32
    return %arg0, %c0_i32, %c0_i32_0 : i32, i32, i32
  }
}

</mosaic_0001>

<llo_original>
// kernel: snet_cifar_forward.2
$region0: #{snet_cifar_forward.2}
  #allocation0 [shape = 'u32[]', space=smem, size = 0x4, offset = 0x4, fixed_abs, tag = 'smem constant byte address 0x4 - core index']
  #allocation1 [shape = 'u32[144,128]{1,0:T(1,128)}', space=vmem, size = 0x12000, scoped, tag = 'internal scratch']
  %s0 = inlined_call_operand.vmem [shape: bf16[392,75], index: 0, kind: input, shape index: {}]
  %s1 = inlined_call_operand.vmem [shape: bf16[75,128], index: 1, kind: input, shape index: {}]
  %s2 = inlined_call_operand.vmem [shape: f32[1,128], index: 2, kind: input, shape index: {}]
  %s3 = inlined_call_operand.vmem [shape: bf16[392,128], index: 3, kind: output, shape index: {}]
  %s4 = sld [smem:[#allocation0]]
  $region22: #{snet_cifar_forward.2} parent=0
    _
  %s6 = ssub.s32 1, %s4
  %s7 = scalar_select 0, %s6, %s4
  // Predicated region
  $region2: #{snet_cifar_forward.2} parent=0 // pred_check
    _
  $region3: #{snet_cifar_forward.2} parent=0 // pred_check_branch
    %9 = sbr.rel (0) target = $region5
  $region4: #{snet_cifar_forward.2} parent=0 // pred_region
    _
  $region5: #{snet_cifar_forward.2} parent=0 // pred_fallthru
    _
  // Predicated region
  $region6: #{snet_cifar_forward.2} parent=0 // pred_check
    _
  $region7: #{snet_cifar_forward.2} parent=0 // pred_check_branch
    %11 = sbr.rel (0) target = $region9
  $region8: #{snet_cifar_forward.2} parent=0 // pred_region
    _
  $region9: #{snet_cifar_forward.2} parent=0 // pred_fallthru
    _
  // Predicated region
  $region10: #{snet_cifar_forward.2} parent=0 // pred_check
    _
  $region11: #{snet_cifar_forward.2} parent=0 // pred_check_branch
    %13 = sbr.rel (0) target = $region13
  $region12: #{snet_cifar_forward.2} parent=0 // pred_region
    _
  $region13: #{snet_cifar_forward.2} parent=0 // pred_fallthru
    _
  %v15 = vld [vmem:[%s0] sm:$0xf]
  %v16 = vld [vmem:[%s0 + $0x4] sm:$0xf]
  %v17 = vld [vmem:[%s0 + $0x8] sm:$0xf]
  %v18 = vld [vmem:[%s0 + $0xc] sm:$0xf]
  %v19 = vld [vmem:[%s0 + $0x10] sm:$0xf]
  %v20 = vld [vmem:[%s0 + $0x14] sm:$0xf]
  %v21 = vld [vmem:[%s0 + $0x18] sm:$0xf]
  %v22 = vld [vmem:[%s0 + $0x1c] sm:$0xf]
  %v23 = vld [vmem:[%s0 + $0x20] sm:$0xf]
  %v24 = vld [vmem:[%s0 + $0x24] sm:$0xf]
  %v25 = vld [vmem:[%s0 + $0x28] sm:$0xf]
  %v26 = vld [vmem:[%s0 + $0x2c] sm:$0xf]
  %v27 = vld [vmem:[%s0 + $0x30] sm:$0xf]
  %v28 = vld [vmem:[%s0 + $0x34] sm:$0xf]
  %v29 = vld [vmem:[%s0 + $0x38] sm:$0xf]
  %v30 = vld [vmem:[%s0 + $0x3c] sm:$0xf]
  %v31 = vld [vmem:[%s0 + $0x40] sm:$0xf]
  %v32 = vld [vmem:[%s0 + $0x44] sm:$0xf]
  %v33 = vld [vmem:[%s0 + $0x48] sm:$0xf]
  %v34 = vld [vmem:[%s0 + $0x4c] sm:$0xf]
  %v35 = vld [vmem:[%s0 + $0x50] sm:$0xf]
  %v36 = vld [vmem:[%s0 + $0x54] sm:$0xf]
  %v37 = vld [vmem:[%s0 + $0x58] sm:$0xf]
  %v38 = vld [vmem:[%s0 + $0x5c] sm:$0xf]
  %v39 = vld [vmem:[%s0 + $0x60] sm:$0xf]
  %v40 = vld [vmem:[%s0 + $0x64] sm:$0xf]
  %v41 = vld [vmem:[%s0 + $0x68] sm:$0xf]
  %v42 = vld [vmem:[%s0 + $0x6c] sm:$0xf]
  %v43 = vld [vmem:[%s0 + $0x70] sm:$0xf]
  %v44 = vld [vmem:[%s0 + $0x74] sm:$0xf]
  %v45 = vld [vmem:[%s0 + $0x78] sm:$0xf]
  %v46 = vld [vmem:[%s0 + $0x7c] sm:$0xf]
  %v47 = vld [vmem:[%s0 + $0x80] sm:$0xf]
  %v48 = vld [vmem:[%s0 + $0x84] sm:$0xf]
  %v49 = vld [vmem:[%s0 + $0x88] sm:$0xf]
  %v50 = vld [vmem:[%s0 + $0x8c] sm:$0xf]
  %v51 = vld [vmem:[%s0 + $0x90] sm:$0xf]
  %v52 = vld [vmem:[%s0 + $0x94] sm:$0xf]
  %v53 = vld [vmem:[%s0 + $0x98] sm:$0xf]
  %v54 = vld [vmem:[%s0 + $0x9c] sm:$0xf]
  %v55 = vld [vmem:[%s0 + $0xa0] sm:$0xf]
  %v56 = vld [vmem:[%s0 + $0xa4] sm:$0xf]
  %v57 = vld [vmem:[%s0 + $0xa8] sm:$0xf]
  %v58 = vld [vmem:[%s0 + $0xac] sm:$0xf]
  %v59 = vld [vmem:[%s0 + $0xb0] sm:$0xf]
  %v60 = vld [vmem:[%s0 + $0xb4] sm:$0xf]
  %v61 = vld [vmem:[%s0 + $0xb8] sm:$0xf]
  %v62 = vld [vmem:[%s0 + $0xbc] sm:$0xf]
  %v63 = vld [vmem:[%s0 + $0xc0] sm:$0xf]
  %v64 = vld [vmem:[%s1] sm:$0xf]
  %v65 = vld [vmem:[%s1 + $0x4] sm:$0xf]
  %v66 = vld [vmem:[%s1 + $0x8] sm:$0xf]
  %v67 = vld [vmem:[%s1 + $0xc] sm:$0xf]
  %v68 = vld [vmem:[%s1 + $0x10] sm:$0xf]
  %v69 = vld [vmem:[%s1 + $0x14] sm:$0xf]
  %v70 = vld [vmem:[%s1 + $0x18] sm:$0xf]
  %v71 = vld [vmem:[%s1 + $0x1c] sm:$0xf]
  %v72 = vld [vmem:[%s1 + $0x20] sm:$0xf]
  %v73 = vld [vmem:[%s1 + $0x24] sm:$0x3]
  %v74 = vld [vmem:[%s2] sm:$0x1]
  %v76 = vlaneseq
  %v77 = vshrl.u32 %v76, 7
  %v78 = vsub.s32 0, %v77
  %v79 = vrot.slane %v74, %v78
  %v130 = vunpack.c.l.b16 %v15
  %v131 = vunpack.c.l.b16 %v16
  %v132 = vunpack.c.l.b16 %v17
  %v133 = vunpack.c.l.b16 %v18
  %v134 = vunpack.c.l.b16 %v19
  %v135 = vunpack.c.l.b16 %v20
  %v136 = vunpack.c.l.b16 %v21
  %v137 = vunpack.c.l.b16 %v22
  %v138 = vunpack.c.l.b16 %v23
  %v139 = vunpack.c.l.b16 %v24
  %v140 = vunpack.c.l.b16 %v25
  %v141 = vunpack.c.l.b16 %v26
  %v142 = vunpack.c.l.b16 %v27
  %v143 = vunpack.c.l.b16 %v28
  %v144 = vunpack.c.l.b16 %v29
  %v145 = vunpack.c.l.b16 %v30
  %v146 = vunpack.c.l.b16 %v31
  %v147 = vunpack.c.l.b16 %v32
  %v148 = vunpack.c.l.b16 %v33
  %v149 = vunpack.c.l.b16 %v34
  %v150 = vunpack.c.l.b16 %v35
  %v151 = vunpack.c.l.b16 %v36
  %v152 = vunpack.c.l.b16 %v37
  %v153 = vunpack.c.l.b16 %v38
  %v154 = vunpack.c.l.b16 %v39
  %v155 = vunpack.c.l.b16 %v40
  %v156 = vunpack.c.l.b16 %v41
  %v157 = vunpack.c.l.b16 %v42
  %v158 = vunpack.c.l.b16 %v43
  %v159 = vunpack.c.l.b16 %v44
  %v160 = vunpack.c.l.b16 %v45
  %v161 = vunpack.c.l.b16 %v46
  %v162 = vunpack.c.l.b16 %v47
  %v163 = vunpack.c.l.b16 %v48
  %v164 = vunpack.c.l.b16 %v49
  %v165 = vunpack.c.l.b16 %v50
  %v166 = vunpack.c.l.b16 %v51
  %v167 = vunpack.c.l.b16 %v52
  %v168 = vunpack.c.l.b16 %v53
  %v169 = vunpack.c.l.b16 %v54
  %v170 = vunpack.c.l.b16 %v55
  %v171 = vunpack.c.l.b16 %v56
  %v172 = vunpack.c.l.b16 %v57
  %v173 = vunpack.c.l.b16 %v58
  %v174 = vunpack.c.l.b16 %v59
  %v175 = vunpack.c.l.b16 %v60
  %v176 = vunpack.c.l.b16 %v61
  %v177 = vunpack.c.l.b16 %v62
  %v178 = vunpack.c.l.b16 %v63
  %v179 = vpack.c.b16 %v131, %v130
  %v180 = vpack.c.b16 %v133, %v132
  %v181 = vpack.c.b16 %v135, %v134
  %v182 = vpack.c.b16 %v137, %v136
  %v183 = vpack.c.b16 %v139, %v138
  %v184 = vpack.c.b16 %v141, %v140
  %v185 = vpack.c.b16 %v143, %v142
  %v186 = vpack.c.b16 %v145, %v144
  %v187 = vpack.c.b16 %v147, %v146
  %v188 = vpack.c.b16 %v149, %v148
  %v189 = vpack.c.b16 %v151, %v150
  %v190 = vpack.c.b16 %v153, %v152
  %v191 = vpack.c.b16 %v155, %v154
  %v192 = vpack.c.b16 %v157, %v156
  %v193 = vpack.c.b16 %v159, %v158
  %v194 = vpack.c.b16 %v161, %v160
  %v195 = vpack.c.b16 %v163, %v162
  %v196 = vpack.c.b16 %v165, %v164
  %v197 = vpack.c.b16 %v167, %v166
  %v198 = vpack.c.b16 %v169, %v168
  %v199 = vpack.c.b16 %v171, %v170
  %v200 = vpack.c.b16 %v173, %v172
  %v201 = vpack.c.b16 %v175, %v174
  %v202 = vpack.c.b16 %v177, %v176
  %v203 = vpack.c.b16 %v178, %v178
  %v214 = vunpack.c.l.b16 %v64
  %v215 = vunpack.c.l.b16 %v65
  %v216 = vunpack.c.l.b16 %v66
  %v217 = vunpack.c.l.b16 %v67
  %v218 = vunpack.c.l.b16 %v68
  %v219 = vunpack.c.l.b16 %v69
  %v220 = vunpack.c.l.b16 %v70
  %v221 = vunpack.c.l.b16 %v71
  %v222 = vunpack.c.l.b16 %v72
  %v223 = vunpack.c.l.b16 %v73
  %v224 = vpack.c.b16 %v215, %v214
  %v225 = vpack.c.b16 %v217, %v216
  %v226 = vpack.c.b16 %v219, %v218
  %v227 = vpack.c.b16 %v221, %v220
  %v228 = vpack.c.b16 %v223, %v222
  %vm233 = vcmask 613376
  %v235 = vsel %vm233, %v179, 0
  %v238 = vsel %vm233, %v180, 0
  %v241 = vsel %vm233, %v181, 0
  %v244 = vsel %vm233, %v182, 0
  %v247 = vsel %vm233, %v183, 0
  %v250 = vsel %vm233, %v184, 0
  %v253 = vsel %vm233, %v185, 0
  %v256 = vsel %vm233, %v186, 0
  %v259 = vsel %vm233, %v187, 0
  %v262 = vsel %vm233, %v188, 0
  %v265 = vsel %vm233, %v189, 0
  %v268 = vsel %vm233, %v190, 0
  %v271 = vsel %vm233, %v191, 0
  %v274 = vsel %vm233, %v192, 0
  %v277 = vsel %vm233, %v193, 0
  %v280 = vsel %vm233, %v194, 0
  %v283 = vsel %vm233, %v195, 0
  %v286 = vsel %vm233, %v196, 0
  %v289 = vsel %vm233, %v197, 0
  %v292 = vsel %vm233, %v198, 0
  %v295 = vsel %vm233, %v199, 0
  %v298 = vsel %vm233, %v200, 0
  %v301 = vsel %vm233, %v201, 0
  %v304 = vsel %vm233, %v202, 0
  %v307 = vsel %vm233, %v203, 0
  %vm309 = vcmask 1044480
  %vm310 = vcmask 1045504
  %v311 = vsel %vm309, 4294967295, 65535
  %v312 = vsel %vm310, %v311, 0
  %v314 = vand.u32 %v228, %v312
  %316 = vmatprep.subr.bf16.mxu0 0
  %317 = vmatpush1.bf16.msra.mxu0 %v224
  %318 = vmatprep.subr.bf16.mxu0 0
  %319 = vmatpush1.bf16.msra.mxu0 %v225
  %320 = vmatprep.subr.bf16.mxu0 0
  %321 = vmatpush1.bf16.msra.mxu0 %v226
  %322 = vmatprep.subr.bf16.mxu0 0
  %323 = vmatpush1.bf16.msra.mxu0 %v227
  %324 = vmatprep.subr.bf16.mxu0 0
  %325 = vmatpush1.bf16.msra.mxu0 %v314
  %326 = vmatprep.subr.bf16.mxu0 0
  %327 = vmatpush1.bf16.msra.mxu0 0
  %328 = vmatprep.subr.bf16.mxu0 0
  %329 = vmatpush1.bf16.msra.mxu0 0
  %330 = vmatprep.subr.bf16.mxu0 0
  %331 = vmatpush1.bf16.msra.mxu0 0
  %332 = vmatprep.subr.bf16.mxu0 0
  %333 = vmatpush1.bf16.msra.mxu0 0
  %334 = vmatprep.subr.bf16.mxu0 0
  %335 = vmatpush1.bf16.msra.mxu0 0
  %336 = vmatprep.subr.bf16.mxu0 0
  %337 = vmatpush1.bf16.msra.mxu0 0
  %338 = vmatprep.subr.bf16.mxu0 0
  %339 = vmatpush1.bf16.msra.mxu0 0
  %340 = vmatprep.subr.bf16.mxu0 0
  %341 = vmatpush1.bf16.msra.mxu0 0
  %342 = vmatprep.subr.bf16.mxu0 0
  %343 = vmatpush1.bf16.msra.mxu0 0
  %344 = vmatprep.subr.bf16.mxu0 0
  %345 = vmatpush1.bf16.msra.mxu0 0
  %346 = vmatprep.subr.bf16.mxu0 0
  %347 = vmatpush1.bf16.msra.mxu0 0
  %348 = vmatprep.mubr.bf16.mxu0 0
  %349 = vmatmul.mubr.bf16.gmra.mrb[0].mxu0 %v235
  %v350 = vpop.f32.mrb[0].mxu0
  %v351 = vadd.f32 %v79, %v350
  %v352 = vpop.f32.mrb[0].mxu0
  %v353 = vpop.f32.mrb[0].mxu0
  %v354 = vadd.f32 %v79, %v353
  %v355 = vpop.f32.mrb[0].mxu0
  %356 = vmatprep.mubr.bf16.mxu0 0
  %357 = vmatmul.mubr.bf16.gmra.mrb[0].mxu0 %v238
  %v358 = vpop.f32.mrb[0].mxu0
  %v359 = vadd.f32 %v79, %v358
  %v360 = vpop.f32.mrb[0].mxu0
  %v361 = vpop.f32.mrb[0].mxu0
  %v362 = vadd.f32 %v79, %v361
  %v363 = vpop.f32.mrb[0].mxu0
  %364 = vmatprep.mubr.bf16.mxu0 0
  %365 = vmatmul.mubr.bf16.gmra.mrb[0].mxu0 %v241
  %v366 = vpop.f32.mrb[0].mxu0
  %v367 = vadd.f32 %v79, %v366
  %v368 = vpop.f32.mrb[0].mxu0
  %v369 = vpop.f32.mrb[0].mxu0
  %v370 = vadd.f32 %v79, %v369
  %v371 = vpop.f32.mrb[0].mxu0
  %372 = vmatprep.mubr.bf16.mxu0 0
  %373 = vmatmul.mubr.bf16.gmra.mrb[0].mxu0 %v244
  %v374 = vpop.f32.mrb[0].mxu0
  %v375 = vadd.f32 %v79, %v374
  %v376 = vpop.f32.mrb[0].mxu0
  %v377 = vpop.f32.mrb[0].mxu0
  %v378 = vadd.f32 %v79, %v377
  %v379 = vpop.f32.mrb[0].mxu0
  %380 = vmatprep.mubr.bf16.mxu0 0
  %381 = vmatmul.mubr.bf16.gmra.mrb[0].mxu0 %v247
  %v382 = vpop.f32.mrb[0].mxu0
  %v383 = vadd.f32 %v79, %v382
  %v384 = vpop.f32.mrb[0].mxu0
  %v385 = vpop.f32.mrb[0].mxu0
  %v386 = vadd.f32 %v79, %v385
  %v387 = vpop.f32.mrb[0].mxu0
  %388 = vmatprep.mubr.bf16.mxu0 0
  %389 = vmatmul.mubr.bf16.gmra.mrb[0].mxu0 %v250
  %v390 = vpop.f32.mrb[0].mxu0
  %v391 = vadd.f32 %v79, %v390
  %v392 = vpop.f32.mrb[0].mxu0
  %v393 = vpop.f32.mrb[0].mxu0
  %v394 = vadd.f32 %v79, %v393
  %v395 = vpop.f32.mrb[0].mxu0
  %396 = vmatprep.mubr.bf16.mxu0 0
  %397 = vmatmul.mubr.bf16.gmra.mrb[0].mxu0 %v253
  %v398 = vpop.f32.mrb[0].mxu0
  %v399 = vadd.f32 %v79, %v398
  %v400 = vpop.f32.mrb[0].mxu0
  %v401 = vpop.f32.mrb[0].mxu0
  %v402 = vadd.f32 %v79, %v401
  %v403 = vpop.f32.mrb[0].mxu0
  %404 = vmatprep.mubr.bf16.mxu0 0
  %405 = vmatmul.mubr.bf16.gmra.mrb[0].mxu0 %v256
  %v406 = vpop.f32.mrb[0].mxu0
  %v407 = vadd.f32 %v79, %v406
  %v408 = vpop.f32.mrb[0].mxu0
  %v409 = vpop.f32.mrb[0].mxu0
  %v410 = vadd.f32 %v79, %v409
  %v411 = vpop.f32.mrb[0].mxu0
  %412 = vmatprep.mubr.bf16.mxu0 0
  %413 = vmatmul.mubr.bf16.gmra.mrb[0].mxu0 %v259
  %v414 = vpop.f32.mrb[0].mxu0
  %v415 = vadd.f32 %v79, %v414
  %v416 = vpop.f32.mrb[0].mxu0
  %v417 = vpop.f32.mrb[0].mxu0
  %v418 = vadd.f32 %v79, %v417
  %v419 = vpop.f32.mrb[0].mxu0
  %420 = vmatprep.mubr.bf16.mxu0 0
  %421 = vmatmul.mubr.bf16.gmra.mrb[0].mxu0 %v262
  %v422 = vpop.f32.mrb[0].mxu0
  %v423 = vadd.f32 %v79, %v422
  %v424 = vpop.f32.mrb[0].mxu0
  %v425 = vpop.f32.mrb[0].mxu0
  %v426 = vadd.f32 %v79, %v425
  %v427 = vpop.f32.mrb[0].mxu0
  %428 = vmatprep.mubr.bf16.mxu0 0
  %429 = vmatmul.mubr.bf16.gmra.mrb[0].mxu0 %v265
  %v430 = vpop.f32.mrb[0].mxu0
  %v431 = vadd.f32 %v79, %v430
  %v432 = vpop.f32.mrb[0].mxu0
  %v433 = vpop.f32.mrb[0].mxu0
  %v434 = vadd.f32 %v79, %v433
  %v435 = vpop.f32.mrb[0].mxu0
  %436 = vmatprep.mubr.bf16.mxu0 0
  %437 = vmatmul.mubr.bf16.gmra.mrb[0].mxu0 %v268
  %v438 = vpop.f32.mrb[0].mxu0
  %v439 = vadd.f32 %v79, %v438
  %v440 = vpop.f32.mrb[0].mxu0
  %v441 = vpop.f32.mrb[0].mxu0
  %v442 = vadd.f32 %v79, %v441
  %v443 = vpop.f32.mrb[0].mxu0
  %444 = vmatprep.mubr.bf16.mxu0 0
  %445 = vmatmul.mubr.bf16.gmra.mrb[0].mxu0 %v271
  %v446 = vpop.f32.mrb[0].mxu0
  %v447 = vadd.f32 %v79, %v446
  %v448 = vpop.f32.mrb[0].mxu0
  %v449 = vpop.f32.mrb[0].mxu0
  %v450 = vadd.f32 %v79, %v449
  %v451 = vpop.f32.mrb[0].mxu0
  %452 = vmatprep.mubr.bf16.mxu0 0
  %453 = vmatmul.mubr.bf16.gmra.mrb[0].mxu0 %v274
  %v454 = vpop.f32.mrb[0].mxu0
  %v455 = vadd.f32 %v79, %v454
  %v456 = vpop.f32.mrb[0].mxu0
  %v457 = vpop.f32.mrb[0].mxu0
  %v458 = vadd.f32 %v79, %v457
  %v459 = vpop.f32.mrb[0].mxu0
  %460 = vmatprep.mubr.bf16.mxu0 0
  %461 = vmatmul.mubr.bf16.gmra.mrb[0].mxu0 %v277
  %v462 = vpop.f32.mrb[0].mxu0
  %v463 = vadd.f32 %v79, %v462
  %v464 = vpop.f32.mrb[0].mxu0
  %v465 = vpop.f32.mrb[0].mxu0
  %v466 = vadd.f32 %v79, %v465
  %v467 = vpop.f32.mrb[0].mxu0
  %468 = vmatprep.mubr.bf16.mxu0 0
  %469 = vmatmul.mubr.bf16.gmra.mrb[0].mxu0 %v280
  %v470 = vpop.f32.mrb[0].mxu0
  %v471 = vadd.f32 %v79, %v470
  %v472 = vpop.f32.mrb[0].mxu0
  %v473 = vpop.f32.mrb[0].mxu0
  %v474 = vadd.f32 %v79, %v473
  %v475 = vpop.f32.mrb[0].mxu0
  %476 = vmatprep.mubr.bf16.mxu0 0
  %477 = vmatmul.mubr.bf16.gmra.mrb[0].mxu0 %v283
  %v478 = vpop.f32.mrb[0].mxu0
  %v479 = vadd.f32 %v79, %v478
  %v480 = vpop.f32.mrb[0].mxu0
  %v481 = vpop.f32.mrb[0].mxu0
  %v482 = vadd.f32 %v79, %v481
  %v483 = vpop.f32.mrb[0].mxu0
  %484 = vmatprep.mubr.bf16.mxu0 0
  %485 = vmatmul.mubr.bf16.gmra.mrb[0].mxu0 %v286
  %v486 = vpop.f32.mrb[0].mxu0
  %v487 = vadd.f32 %v79, %v486
  %v488 = vpop.f32.mrb[0].mxu0
  %v489 = vpop.f32.mrb[0].mxu0
  %v490 = vadd.f32 %v79, %v489
  %v491 = vpop.f32.mrb[0].mxu0
  %492 = vmatprep.mubr.bf16.mxu0 0
  %493 = vmatmul.mubr.bf16.gmra.mrb[0].mxu0 %v289
  %v494 = vpop.f32.mrb[0].mxu0
  %v495 = vadd.f32 %v79, %v494
  %v496 = vpop.f32.mrb[0].mxu0
  %v497 = vpop.f32.mrb[0].mxu0
  %v498 = vadd.f32 %v79, %v497
  %v499 = vpop.f32.mrb[0].mxu0
  %500 = vmatprep.mubr.bf16.mxu0 0
  %501 = vmatmul.mubr.bf16.gmra.mrb[0].mxu0 %v292
  %v502 = vpop.f32.mrb[0].mxu0
  %v503 = vadd.f32 %v79, %v502
  %v504 = vpop.f32.mrb[0].mxu0
  %v505 = vpop.f32.mrb[0].mxu0
  %v506 = vadd.f32 %v79, %v505
  %v507 = vpop.f32.mrb[0].mxu0
  %508 = vmatprep.mubr.bf16.mxu0 0
  %509 = vmatmul.mubr.bf16.gmra.mrb[0].mxu0 %v295
  %v510 = vpop.f32.mrb[0].mxu0
  %v511 = vadd.f32 %v79, %v510
  %v512 = vpop.f32.mrb[0].mxu0
  %v513 = vpop.f32.mrb[0].mxu0
  %v514 = vadd.f32 %v79, %v513
  %v515 = vpop.f32.mrb[0].mxu0
  %516 = vmatprep.mubr.bf16.mxu0 0
  %517 = vmatmul.mubr.bf16.gmra.mrb[0].mxu0 %v298
  %v518 = vpop.f32.mrb[0].mxu0
  %v519 = vadd.f32 %v79, %v518
  %v520 = vpop.f32.mrb[0].mxu0
  %v521 = vpop.f32.mrb[0].mxu0
  %v522 = vadd.f32 %v79, %v521
  %v523 = vpop.f32.mrb[0].mxu0
  %524 = vmatprep.mubr.bf16.mxu0 0
  %525 = vmatmul.mubr.bf16.gmra.mrb[0].mxu0 %v301
  %v526 = vpop.f32.mrb[0].mxu0
  %v527 = vadd.f32 %v79, %v526
  %v528 = vpop.f32.mrb[0].mxu0
  %v529 = vpop.f32.mrb[0].mxu0
  %v530 = vadd.f32 %v79, %v529
  %v531 = vpop.f32.mrb[0].mxu0
  %532 = vmatprep.mubr.bf16.mxu0 0
  %533 = vmatmul.mubr.bf16.gmra.mrb[0].mxu0 %v304
  %v534 = vpop.f32.mrb[0].mxu0
  %v535 = vadd.f32 %v79, %v534
  %v536 = vpop.f32.mrb[0].mxu0
  %v537 = vpop.f32.mrb[0].mxu0
  %v538 = vadd.f32 %v79, %v537
  %v539 = vpop.f32.mrb[0].mxu0
  %540 = vmatprep.mubr.bf16.mxu0 0
  %541 = vmatmul.mubr.bf16.gmra.mrb[0].mxu0 %v307
  %v542 = vpop.f32.mrb[0].mxu0
  %v543 = vadd.f32 %v79, %v542
  %v544 = vpop.f32.mrb[0].mxu0
  %v545 = vpop.f32.mrb[0].mxu0
  %v546 = vpop.f32.mrb[0].mxu0
  %547 = vdwg.mxu0
  %v548 = vmax.f32 %v351, 0.0
  %v549 = vmax.f32 %v354, 0.0
  %v550 = vmax.f32 %v359, 0.0
  %v551 = vmax.f32 %v362, 0.0
  %v552 = vmax.f32 %v367, 0.0
  %v553 = vmax.f32 %v370, 0.0
  %v554 = vmax.f32 %v375, 0.0
  %v555 = vmax.f32 %v378, 0.0
  %v556 = vmax.f32 %v383, 0.0
  %v557 = vmax.f32 %v386, 0.0
  %v558 = vmax.f32 %v391, 0.0
  %v559 = vmax.f32 %v394, 0.0
  %v560 = vmax.f32 %v399, 0.0
  %v561 = vmax.f32 %v402, 0.0
  %v562 = vmax.f32 %v407, 0.0
  %v563 = vmax.f32 %v410, 0.0
  %v564 = vmax.f32 %v415, 0.0
  %v565 = vmax.f32 %v418, 0.0
  %v566 = vmax.f32 %v423, 0.0
  %v567 = vmax.f32 %v426, 0.0
  %v568 = vmax.f32 %v431, 0.0
  %v569 = vmax.f32 %v434, 0.0
  %v570 = vmax.f32 %v439, 0.0
  %v571 = vmax.f32 %v442, 0.0
  %v572 = vmax.f32 %v447, 0.0
  %v573 = vmax.f32 %v450, 0.0
  %v574 = vmax.f32 %v455, 0.0
  %v575 = vmax.f32 %v458, 0.0
  %v576 = vmax.f32 %v463, 0.0
  %v577 = vmax.f32 %v466, 0.0
  %v578 = vmax.f32 %v471, 0.0
  %v579 = vmax.f32 %v474, 0.0
  %v580 = vmax.f32 %v479, 0.0
  %v581 = vmax.f32 %v482, 0.0
  %v582 = vmax.f32 %v487, 0.0
  %v583 = vmax.f32 %v490, 0.0
  %v584 = vmax.f32 %v495, 0.0
  %v585 = vmax.f32 %v498, 0.0
  %v586 = vmax.f32 %v503, 0.0
  %v587 = vmax.f32 %v506, 0.0
  %v588 = vmax.f32 %v511, 0.0
  %v589 = vmax.f32 %v514, 0.0
  %v590 = vmax.f32 %v519, 0.0
  %v591 = vmax.f32 %v522, 0.0
  %v592 = vmax.f32 %v527, 0.0
  %v593 = vmax.f32 %v530, 0.0
  %v594 = vmax.f32 %v535, 0.0
  %v595 = vmax.f32 %v538, 0.0
  %v596 = vmax.f32 %v543, 0.0
  %v597 = vpack.c.bf16 %v549, %v548
  %v598 = vpack.c.bf16 %v551, %v550
  %v599 = vpack.c.bf16 %v553, %v552
  %v600 = vpack.c.bf16 %v555, %v554
  %v601 = vpack.c.bf16 %v557, %v556
  %v602 = vpack.c.bf16 %v559, %v558
  %v603 = vpack.c.bf16 %v561, %v560
  %v604 = vpack.c.bf16 %v563, %v562
  %v605 = vpack.c.bf16 %v565, %v564
  %v606 = vpack.c.bf16 %v567, %v566
  %v607 = vpack.c.bf16 %v569, %v568
  %v608 = vpack.c.bf16 %v571, %v570
  %v609 = vpack.c.bf16 %v573, %v572
  %v610 = vpack.c.bf16 %v575, %v574
  %v611 = vpack.c.bf16 %v577, %v576
  %v612 = vpack.c.bf16 %v579, %v578
  %v613 = vpack.c.bf16 %v581, %v580
  %v614 = vpack.c.bf16 %v583, %v582
  %v615 = vpack.c.bf16 %v585, %v584
  %v616 = vpack.c.bf16 %v587, %v586
  %v617 = vpack.c.bf16 %v589, %v588
  %v618 = vpack.c.bf16 %v591, %v590
  %v619 = vpack.c.bf16 %v593, %v592
  %v620 = vpack.c.bf16 %v595, %v594
  %v621 = vpack.c.bf16 %v596, %v596
  %v647 = vunpack.c.l.b16 %v597
  %v648 = vunpack.c.h.b16 %v597
  %v649 = vunpack.c.l.b16 %v598
  %v650 = vunpack.c.h.b16 %v598
  %v651 = vunpack.c.l.b16 %v599
  %v652 = vunpack.c.h.b16 %v599
  %v653 = vunpack.c.l.b16 %v600
  %v654 = vunpack.c.h.b16 %v600
  %v655 = vunpack.c.l.b16 %v601
  %v656 = vunpack.c.h.b16 %v601
  %v657 = vunpack.c.l.b16 %v602
  %v658 = vunpack.c.h.b16 %v602
  %v659 = vunpack.c.l.b16 %v603
  %v660 = vunpack.c.h.b16 %v603
  %v661 = vunpack.c.l.b16 %v604
  %v662 = vunpack.c.h.b16 %v604
  %v663 = vunpack.c.l.b16 %v605
  %v664 = vunpack.c.h.b16 %v605
  %v665 = vunpack.c.l.b16 %v606
  %v666 = vunpack.c.h.b16 %v606
  %v667 = vunpack.c.l.b16 %v607
  %v668 = vunpack.c.h.b16 %v607
  %v669 = vunpack.c.l.b16 %v608
  %v670 = vunpack.c.h.b16 %v608
  %v671 = vunpack.c.l.b16 %v609
  %v672 = vunpack.c.h.b16 %v609
  %v673 = vunpack.c.l.b16 %v610
  %v674 = vunpack.c.h.b16 %v610
  %v675 = vunpack.c.l.b16 %v611
  %v676 = vunpack.c.h.b16 %v611
  %v677 = vunpack.c.l.b16 %v612
  %v678 = vunpack.c.h.b16 %v612
  %v679 = vunpack.c.l.b16 %v613
  %v680 = vunpack.c.h.b16 %v613
  %v681 = vunpack.c.l.b16 %v614
  %v682 = vunpack.c.h.b16 %v614
  %v683 = vunpack.c.l.b16 %v615
  %v684 = vunpack.c.h.b16 %v615
  %v685 = vunpack.c.l.b16 %v616
  %v686 = vunpack.c.h.b16 %v616
  %v687 = vunpack.c.l.b16 %v617
  %v688 = vunpack.c.h.b16 %v617
  %v689 = vunpack.c.l.b16 %v618
  %v690 = vunpack.c.h.b16 %v618
  %v691 = vunpack.c.l.b16 %v619
  %v692 = vunpack.c.h.b16 %v619
  %v693 = vunpack.c.l.b16 %v620
  %v694 = vunpack.c.h.b16 %v620
  %v695 = vunpack.c.l.b16 %v621
  %v696 = vpack.c.b16 %v647, %v647
  %v697 = vpack.c.b16 %v648, %v648
  %v698 = vpack.c.b16 %v649, %v649
  %v699 = vpack.c.b16 %v650, %v650
  %v700 = vpack.c.b16 %v651, %v651
  %v701 = vpack.c.b16 %v652, %v652
  %v702 = vpack.c.b16 %v653, %v653
  %v703 = vpack.c.b16 %v654, %v654
  %v704 = vpack.c.b16 %v655, %v655
  %v705 = vpack.c.b16 %v656, %v656
  %v706 = vpack.c.b16 %v657, %v657
  %v707 = vpack.c.b16 %v658, %v658
  %v708 = vpack.c.b16 %v659, %v659
  %v709 = vpack.c.b16 %v660, %v660
  %v710 = vpack.c.b16 %v661, %v661
  %v711 = vpack.c.b16 %v662, %v662
  %v712 = vpack.c.b16 %v663, %v663
  %v713 = vpack.c.b16 %v664, %v664
  %v714 = vpack.c.b16 %v665, %v665
  %v715 = vpack.c.b16 %v666, %v666
  %v716 = vpack.c.b16 %v667, %v667
  %v717 = vpack.c.b16 %v668, %v668
  %v718 = vpack.c.b16 %v669, %v669
  %v719 = vpack.c.b16 %v670, %v670
  %v720 = vpack.c.b16 %v671, %v671
  %v721 = vpack.c.b16 %v672, %v672
  %v722 = vpack.c.b16 %v673, %v673
  %v723 = vpack.c.b16 %v674, %v674
  %v724 = vpack.c.b16 %v675, %v675
  %v725 = vpack.c.b16 %v676, %v676
  %v726 = vpack.c.b16 %v677, %v677
  %v727 = vpack.c.b16 %v678, %v678
  %v728 = vpack.c.b16 %v679, %v679
  %v729 = vpack.c.b16 %v680, %v680
  %v730 = vpack.c.b16 %v681, %v681
  %v731 = vpack.c.b16 %v682, %v682
  %v732 = vpack.c.b16 %v683, %v683
  %v733 = vpack.c.b16 %v684, %v684
  %v734 = vpack.c.b16 %v685, %v685
  %v735 = vpack.c.b16 %v686, %v686
  %v736 = vpack.c.b16 %v687, %v687
  %v737 = vpack.c.b16 %v688, %v688
  %v738 = vpack.c.b16 %v689, %v689
  %v739 = vpack.c.b16 %v690, %v690
  %v740 = vpack.c.b16 %v691, %v691
  %v741 = vpack.c.b16 %v692, %v692
  %v742 = vpack.c.b16 %v693, %v693
  %v743 = vpack.c.b16 %v694, %v694
  %v744 = vpack.c.b16 %v695, %v695
  %794 = vst [vmem:[%s3] sm:$0xf] %v696
  %795 = vst [vmem:[%s3 + $0x4] sm:$0xf] %v697
  %796 = vst [vmem:[%s3 + $0x8] sm:$0xf] %v698
  %797 = vst [vmem:[%s3 + $0xc] sm:$0xf] %v699
  %798 = vst [vmem:[%s3 + $0x10] sm:$0xf] %v700
  %799 = vst [vmem:[%s3 + $0x14] sm:$0xf] %v701
  %800 = vst [vmem:[%s3 + $0x18] sm:$0xf] %v702
  %801 = vst [vmem:[%s3 + $0x1c] sm:$0xf] %v703
  %802 = vst [vmem:[%s3 + $0x20] sm:$0xf] %v704
  %803 = vst [vmem:[%s3 + $0x24] sm:$0xf] %v705
  %804 = vst [vmem:[%s3 + $0x28] sm:$0xf] %v706
  %805 = vst [vmem:[%s3 + $0x2c] sm:$0xf] %v707
  %806 = vst [vmem:[%s3 + $0x30] sm:$0xf] %v708
  %807 = vst [vmem:[%s3 + $0x34] sm:$0xf] %v709
  %808 = vst [vmem:[%s3 + $0x38] sm:$0xf] %v710
  %809 = vst [vmem:[%s3 + $0x3c] sm:$0xf] %v711
  %810 = vst [vmem:[%s3 + $0x40] sm:$0xf] %v712
  %811 = vst [vmem:[%s3 + $0x44] sm:$0xf] %v713
  %812 = vst [vmem:[%s3 + $0x48] sm:$0xf] %v714
  %813 = vst [vmem:[%s3 + $0x4c] sm:$0xf] %v715
  %814 = vst [vmem:[%s3 + $0x50] sm:$0xf] %v716
  %815 = vst [vmem:[%s3 + $0x54] sm:$0xf] %v717
  %816 = vst [vmem:[%s3 + $0x58] sm:$0xf] %v718
  %817 = vst [vmem:[%s3 + $0x5c] sm:$0xf] %v719
  %818 = vst [vmem:[%s3 + $0x60] sm:$0xf] %v720
  %819 = vst [vmem:[%s3 + $0x64] sm:$0xf] %v721
  %820 = vst [vmem:[%s3 + $0x68] sm:$0xf] %v722
  %821 = vst [vmem:[%s3 + $0x6c] sm:$0xf] %v723
  %822 = vst [vmem:[%s3 + $0x70] sm:$0xf] %v724
  %823 = vst [vmem:[%s3 + $0x74] sm:$0xf] %v725
  %824 = vst [vmem:[%s3 + $0x78] sm:$0xf] %v726
  %825 = vst [vmem:[%s3 + $0x7c] sm:$0xf] %v727
  %826 = vst [vmem:[%s3 + $0x80] sm:$0xf] %v728
  %827 = vst [vmem:[%s3 + $0x84] sm:$0xf] %v729
  %828 = vst [vmem:[%s3 + $0x88] sm:$0xf] %v730
  %829 = vst [vmem:[%s3 + $0x8c] sm:$0xf] %v731
  %830 = vst [vmem:[%s3 + $0x90] sm:$0xf] %v732
  %831 = vst [vmem:[%s3 + $0x94] sm:$0xf] %v733
  %832 = vst [vmem:[%s3 + $0x98] sm:$0xf] %v734
  %833 = vst [vmem:[%s3 + $0x9c] sm:$0xf] %v735
  %834 = vst [vmem:[%s3 + $0xa0] sm:$0xf] %v736
  %835 = vst [vmem:[%s3 + $0xa4] sm:$0xf] %v737
  %836 = vst [vmem:[%s3 + $0xa8] sm:$0xf] %v738
  %837 = vst [vmem:[%s3 + $0xac] sm:$0xf] %v739
  %838 = vst [vmem:[%s3 + $0xb0] sm:$0xf] %v740
  %839 = vst [vmem:[%s3 + $0xb4] sm:$0xf] %v741
  %840 = vst [vmem:[%s3 + $0xb8] sm:$0xf] %v742
  %841 = vst [vmem:[%s3 + $0xbc] sm:$0xf] %v743
  %842 = vst [vmem:[%s3 + $0xc0] sm:$0xf] %v744
  // Predicated region
  $region14: #{snet_cifar_forward.2} parent=0 // pred_check
    _
  $region15: #{snet_cifar_forward.2} parent=0 // pred_check_branch
    %844 = sbr.rel (0) target = $region17
  $region16: #{snet_cifar_forward.2} parent=0 // pred_region
    _
  $region17: #{snet_cifar_forward.2} parent=0 // pred_fallthru
    _
  // Predicated region
  $region18: #{snet_cifar_forward.2} parent=0 // pred_check
    _
  $region19: #{snet_cifar_forward.2} parent=0 // pred_check_branch
    %846 = sbr.rel (0) target = $region21
  $region20: #{snet_cifar_forward.2} parent=0 // pred_region
    _
  $region21: #{snet_cifar_forward.2} parent=0 // pred_fallthru
    _

// kernel: snet_cifar_forward.3
$region0: #{snet_cifar_forward.3}
  #allocation0 [shape = 'u32[]', space=smem, size = 0x4, offset = 0x4, fixed_abs, tag = 'smem constant byte address 0x4 - core index']
  #allocation1 [shape = 'u32[144,128]{1,0:T(1,128)}', space=vmem, size = 0x12000, scoped, tag = 'internal scratch']
  %s0 = inlined_call_operand.vmem [shape: bf16[2,25,800], index: 0, kind: input, shape index: {}]
  %s1 = inlined_call_operand.vmem [shape: bf16[800,128], index: 1, kind: input, shape index: {}]
  %s2 = inlined_call_operand.vmem [shape: f32[1,128], index: 2, kind: input, shape index: {}]
  %s3 = inlined_call_operand.vmem [shape: f32[128,84], index: 3, kind: input, shape index: {}]
  %s4 = inlined_call_operand.vmem [shape: f32[1,84], index: 4, kind: input, shape index: {}]
  %s5 = inlined_call_operand.vmem [shape: f32[84,10], index: 5, kind: input, shape index: {}]
  %s6 = inlined_call_operand.vmem [shape: f32[1,10], index: 6, kind: input, shape index: {}]
  %s7 = inlined_call_operand.hbm [shape: f32[2,1,10], index: 7, kind: output, shape index: {}]
  %s8 = sld [smem:[#allocation0]]
  $region61: #{snet_cifar_forward.3} parent=0
    _
  %s10 = ssub.s32 1, %s8
  %s11 = scalar_select 0, %s10, %s8
  $region1: #{snet_cifar_forward.3} parent=0
    #allocation2 [shape = 'u8[1024]{0}', space=vmem, size = 0x400, scoped, tag = 'output window, operand 0']
    #allocation3 [shape = 's32[2]{0}', space=sflag, size = 0x8, scoped, tag = 'scoped memory for snet_cifar_forward.3']
    %12 = vsyncpa [#allocation3], 0
    %s13 = scalar_lea.sflag [#allocation3], 1
    %14 = vsyncpa %s13, 0
    loop: start=0, step=1, limit=4
    $region2: #{snet_cifar_forward.3} parent=1 // loop_pre_header
      _
    $region3: #{snet_cifar_forward.3} parent=1 // loop_header
      %s16 = sphi 0, %s20
      %p17 = scmp.ge.s32.totalorder %s16, 4
      %s26 = sphi 0, %s28
      %s29 = sphi 0, %s26
      %s30 = sphi 0, %s29
      %s46 = sphi 0, %s30
      %s50 = sphi 0, %s50
      %s52 = sphi 0, %s50
      %s53 = sphi 0, %s52
      %s67 = sphi 0, %s53
      %s71 = sphi 0, %s71
      %s73 = sphi 0, %s71
      %s74 = sphi 0, %s73
      %s88 = sphi 0, %s74
      %s92 = sphi 0, %s92
      %s94 = sphi 0, %s92
      %s95 = sphi 0, %s94
      %s109 = sphi 0, %s95
      %s113 = sphi 0, %s113
      %s115 = sphi 0, %s113
      %s116 = sphi 0, %s115
      %s130 = sphi 0, %s116
      %s134 = sphi 0, %s134
      %s136 = sphi 0, %s134
      %s137 = sphi 0, %s136
      %s151 = sphi 0, %s137
      %s155 = sphi 0, %s155
      %s157 = sphi 0, %s155
      %s158 = sphi 0, %s157
      %s172 = sphi 0, %s158
      %s178 = sphi 0, %s180
      %s181 = sphi 0, %s178
      %s182 = sphi 0, %s181
      %s198 = sphi 0, %s182
    $region4: #{snet_cifar_forward.3} parent=1 // loop_header_branch
      %19 = sbr.rel (%p17) target = $region8
    $region5: #{snet_cifar_forward.3} parent=1 // loop_body
      %s21 = ssub.s32 %s16, 1
      %s22 = ssub.s32 %s16, 2
      %s23 = sadd.s32 %s16, 1
      %s24 = ssub.s32 %s16, %s23
      %p25 = scmp.eq.s32.totalorder %s24, 0
      %s27 = sadd.s32 %s26, 1
      %s28 = scalar_select %p25, %s26, %s27
      %p31 = pneg %p25
      %p32 = scmp.eq.s32.totalorder %s16, 1
      %p33 = por %p31, %p32
      %p34 = scmp.ne.s32.totalorder %s26, %s29
      %p35 = scmp.eq.s32.totalorder %s16, 0
      %p36 = por %p34, %p35
      %p37 = scmp.ne.s32.totalorder %s26, %s29
      %p38 = scmp.eq.s32.totalorder %s21, 1
      %p39 = por %p37, %p38
      %p40 = scmp.ne.s32.totalorder %s29, %s30
      %p41 = scmp.eq.s32.totalorder %s21, 0
      %p42 = por %p40, %p41
      %p43 = scmp.ne.s32.totalorder %s29, %s30
      %p44 = scmp.eq.s32.totalorder %s22, 1
      %p45 = por %p43, %p44
      %p47 = scmp.ne.s32.totalorder %s30, %s46
      %p48 = scmp.eq.s32.totalorder %s22, 0
      %p49 = por %p47, %p48
      %s51 = sadd.s32 %s50, 1
      %p54 = scmp.eq.s32.totalorder %s16, 1
      %p55 = scmp.ne.s32.totalorder %s50, %s52
      %p56 = scmp.eq.s32.totalorder %s16, 0
      %p57 = por %p55, %p56
      %p58 = scmp.ne.s32.totalorder %s50, %s52
      %p59 = scmp.eq.s32.totalorder %s21, 1
      %p60 = por %p58, %p59
      %p61 = scmp.ne.s32.totalorder %s52, %s53
      %p62 = scmp.eq.s32.totalorder %s21, 0
      %p63 = por %p61, %p62
      %p64 = scmp.ne.s32.totalorder %s52, %s53
      %p65 = scmp.eq.s32.totalorder %s22, 1
      %p66 = por %p64, %p65
      %p68 = scmp.ne.s32.totalorder %s53, %s67
      %p69 = scmp.eq.s32.totalorder %s22, 0
      %p70 = por %p68, %p69
      %s72 = sadd.s32 %s71, 1
      %p75 = scmp.eq.s32.totalorder %s16, 1
      %p76 = scmp.ne.s32.totalorder %s71, %s73
      %p77 = scmp.eq.s32.totalorder %s16, 0
      %p78 = por %p76, %p77
      %p79 = scmp.ne.s32.totalorder %s71, %s73
      %p80 = scmp.eq.s32.totalorder %s21, 1
      %p81 = por %p79, %p80
      %p82 = scmp.ne.s32.totalorder %s73, %s74
      %p83 = scmp.eq.s32.totalorder %s21, 0
      %p84 = por %p82, %p83
      %p85 = scmp.ne.s32.totalorder %s73, %s74
      %p86 = scmp.eq.s32.totalorder %s22, 1
      %p87 = por %p85, %p86
      %p89 = scmp.ne.s32.totalorder %s74, %s88
      %p90 = scmp.eq.s32.totalorder %s22, 0
      %p91 = por %p89, %p90
      %s93 = sadd.s32 %s92, 1
      %p96 = scmp.eq.s32.totalorder %s16, 1
      %p97 = scmp.ne.s32.totalorder %s92, %s94
      %p98 = scmp.eq.s32.totalorder %s16, 0
      %p99 = por %p97, %p98
      %p100 = scmp.ne.s32.totalorder %s92, %s94
      %p101 = scmp.eq.s32.totalorder %s21, 1
      %p102 = por %p100, %p101
      %p103 = scmp.ne.s32.totalorder %s94, %s95
      %p104 = scmp.eq.s32.totalorder %s21, 0
      %p105 = por %p103, %p104
      %p106 = scmp.ne.s32.totalorder %s94, %s95
      %p107 = scmp.eq.s32.totalorder %s22, 1
      %p108 = por %p106, %p107
      %p110 = scmp.ne.s32.totalorder %s95, %s109
      %p111 = scmp.eq.s32.totalorder %s22, 0
      %p112 = por %p110, %p111
      %s114 = sadd.s32 %s113, 1
      %p117 = scmp.eq.s32.totalorder %s16, 1
      %p118 = scmp.ne.s32.totalorder %s113, %s115
      %p119 = scmp.eq.s32.totalorder %s16, 0
      %p120 = por %p118, %p119
      %p121 = scmp.ne.s32.totalorder %s113, %s115
      %p122 = scmp.eq.s32.totalorder %s21, 1
      %p123 = por %p121, %p122
      %p124 = scmp.ne.s32.totalorder %s115, %s116
      %p125 = scmp.eq.s32.totalorder %s21, 0
      %p126 = por %p124, %p125
      %p127 = scmp.ne.s32.totalorder %s115, %s116
      %p128 = scmp.eq.s32.totalorder %s22, 1
      %p129 = por %p127, %p128
      %p131 = scmp.ne.s32.totalorder %s116, %s130
      %p132 = scmp.eq.s32.totalorder %s22, 0
      %p133 = por %p131, %p132
      %s135 = sadd.s32 %s134, 1
      %p138 = scmp.eq.s32.totalorder %s16, 1
      %p139 = scmp.ne.s32.totalorder %s134, %s136
      %p140 = scmp.eq.s32.totalorder %s16, 0
      %p141 = por %p139, %p140
      %p142 = scmp.ne.s32.totalorder %s134, %s136
      %p143 = scmp.eq.s32.totalorder %s21, 1
      %p144 = por %p142, %p143
      %p145 = scmp.ne.s32.totalorder %s136, %s137
      %p146 = scmp.eq.s32.totalorder %s21, 0
      %p147 = por %p145, %p146
      %p148 = scmp.ne.s32.totalorder %s136, %s137
      %p149 = scmp.eq.s32.totalorder %s22, 1
      %p150 = por %p148, %p149
      %p152 = scmp.ne.s32.totalorder %s137, %s151
      %p153 = scmp.eq.s32.totalorder %s22, 0
      %p154 = por %p152, %p153
      %s156 = sadd.s32 %s155, 1
      %p159 = scmp.eq.s32.totalorder %s16, 1
      %p160 = scmp.ne.s32.totalorder %s155, %s157
      %p161 = scmp.eq.s32.totalorder %s16, 0
      %p162 = por %p160, %p161
      %p163 = scmp.ne.s32.totalorder %s155, %s157
      %p164 = scmp.eq.s32.totalorder %s21, 1
      %p165 = por %p163, %p164
      %p166 = scmp.ne.s32.totalorder %s157, %s158
      %p167 = scmp.eq.s32.totalorder %s21, 0
      %p168 = por %p166, %p167
      %p169 = scmp.ne.s32.totalorder %s157, %s158
      %p170 = scmp.eq.s32.totalorder %s22, 1
      %p171 = por %p169, %p170
      %p173 = scmp.ne.s32.totalorder %s158, %s172
      %p174 = scmp.eq.s32.totalorder %s22, 0
      %p175 = por %p173, %p174
      %s176 = ssub.s32 %s16, %s23
      %p177 = scmp.eq.s32.totalorder %s176, 0
      %s179 = sadd.s32 %s178, 1
      %s180 = scalar_select %p177, %s178, %s179
      %p183 = pneg %p177
      %p184 = scmp.eq.s32.totalorder %s16, 1
      %p185 = por %p183, %p184
      %p186 = scmp.ne.s32.totalorder %s178, %s181
      %p187 = scmp.eq.s32.totalorder %s16, 0
      %p188 = por %p186, %p187
      %p189 = scmp.ne.s32.totalorder %s178, %s181
      %p190 = scmp.eq.s32.totalorder %s21, 1
      %p191 = por %p189, %p190
      %p192 = scmp.ne.s32.totalorder %s181, %s182
      %p193 = scmp.eq.s32.totalorder %s21, 0
      %p194 = por %p192, %p193
      %p195 = scmp.ne.s32.totalorder %s181, %s182
      %p196 = scmp.eq.s32.totalorder %s22, 1
      %p197 = por %p195, %p196
      %p199 = scmp.ne.s32.totalorder %s182, %s198
      %p200 = scmp.eq.s32.totalorder %s22, 0
      %p201 = por %p199, %p200
      %p202 = scmp.le.s32.totalorder 1, %s16
      %p203 = scmp.lt.s32.totalorder %s16, 3
      %p204 = pnand %p202, %p203
      %p205 = pneg %p204
      // Predicated region
      $region9: #{snet_cifar_forward.3} parent=5 // pred_check
        _
      $region10: #{snet_cifar_forward.3} parent=5 // pred_check_branch
        %207 = sbr.rel (%p204) target = $region12
      $region11: #{snet_cifar_forward.3} parent=5 // pred_region
        %s208 = ssub.s32 %s16, 1
        // Predicated region
        $region13: #{snet_cifar_forward.3} parent=11 // pred_check
          %p209 = pneg %p63
        $region14: #{snet_cifar_forward.3} parent=11 // pred_check_branch
          %211 = sbr.rel (%p209) target = $region16
        $region15: #{snet_cifar_forward.3} parent=11 // pred_region
          _
        $region16: #{snet_cifar_forward.3} parent=11 // pred_fallthru
          _
        // Predicated region
        $region17: #{snet_cifar_forward.3} parent=11 // pred_check
          %p212 = pneg %p84
        $region18: #{snet_cifar_forward.3} parent=11 // pred_check_branch
          %214 = sbr.rel (%p212) target = $region20
        $region19: #{snet_cifar_forward.3} parent=11 // pred_region
          _
        $region20: #{snet_cifar_forward.3} parent=11 // pred_fallthru
          _
        // Predicated region
        $region21: #{snet_cifar_forward.3} parent=11 // pred_check
          %p215 = pneg %p105
        $region22: #{snet_cifar_forward.3} parent=11 // pred_check_branch
          %217 = sbr.rel (%p215) target = $region24
        $region23: #{snet_cifar_forward.3} parent=11 // pred_region
          _
        $region24: #{snet_cifar_forward.3} parent=11 // pred_fallthru
          _
        // Predicated region
        $region25: #{snet_cifar_forward.3} parent=11 // pred_check
          %p218 = pneg %p126
        $region26: #{snet_cifar_forward.3} parent=11 // pred_check_branch
          %220 = sbr.rel (%p218) target = $region28
        $region27: #{snet_cifar_forward.3} parent=11 // pred_region
          _
        $region28: #{snet_cifar_forward.3} parent=11 // pred_fallthru
          _
        // Predicated region
        $region29: #{snet_cifar_forward.3} parent=11 // pred_check
          %p221 = pneg %p147
        $region30: #{snet_cifar_forward.3} parent=11 // pred_check_branch
          %223 = sbr.rel (%p221) target = $region32
        $region31: #{snet_cifar_forward.3} parent=11 // pred_region
          _
        $region32: #{snet_cifar_forward.3} parent=11 // pred_fallthru
          _
        // Predicated region
        $region33: #{snet_cifar_forward.3} parent=11 // pred_check
          %p224 = pneg %p168
        $region34: #{snet_cifar_forward.3} parent=11 // pred_check_branch
          %226 = sbr.rel (%p224) target = $region36
        $region35: #{snet_cifar_forward.3} parent=11 // pred_region
          _
        $region36: #{snet_cifar_forward.3} parent=11 // pred_fallthru
          _
      $region12: #{snet_cifar_forward.3} parent=5 // pred_fallthru
        _
      %p227 = scmp.lt.s32.totalorder %s16, 2
      // Predicated region
      $region37: #{snet_cifar_forward.3} parent=5 // pred_check
        %p228 = pneg %p227
      $region38: #{snet_cifar_forward.3} parent=5 // pred_check_branch
        %230 = sbr.rel (%p228) target = $region40
      $region39: #{snet_cifar_forward.3} parent=5 // pred_region
        // Predicated region
        $region41: #{snet_cifar_forward.3} parent=39 // pred_check
          %p231 = pneg %p36
        $region42: #{snet_cifar_forward.3} parent=39 // pred_check_branch
          %233 = sbr.rel (%p231) target = $region44
        $region43: #{snet_cifar_forward.3} parent=39 // pred_region
          %p234 = scmp.lt.s32.totalorder %s16, 1
          %s235 = scalar_select %p234, %s16, 1
          %s236 = smul.addr %s235, 28
          %s237 = smul.addr %s236, 4
          %s238 = scalar_lea.vmem %s0, %s237
        $region44: #{snet_cifar_forward.3} parent=39 // pred_fallthru
          _
      $region40: #{snet_cifar_forward.3} parent=5 // pred_fallthru
        _
      %p239 = scmp.le.s32.totalorder 1, %s16
      %p240 = scmp.lt.s32.totalorder %s16, 3
      %p241 = pnand %p239, %p240
      %p242 = pneg %p241
      // Predicated region
      $region45: #{snet_cifar_forward.3} parent=5 // pred_check
        _
      $region46: #{snet_cifar_forward.3} parent=5 // pred_check_branch
        %244 = sbr.rel (%p241) target = $region48
      $region47: #{snet_cifar_forward.3} parent=5 // pred_region
        %s245 = ssub.s32 %s16, 1
        %p246 = scmp.lt.s32.totalorder %s21, 1
        %s247 = scalar_select %p246, %s21, 1
        %s248 = smul.addr %s247, 28
        %s249 = smul.addr %s248, 4
        %s250 = scalar_lea.vmem %s0, %s249
        %p251 = pneg %p42
        %p252 = pneg %p39
        %p253 = pneg %p63
        %p254 = pneg %p60
        %p255 = pneg %p84
        %p256 = pneg %p81
        %p257 = pneg %p105
        %p258 = pneg %p102
        %p259 = pneg %p126
        %p260 = pneg %p123
        %p261 = pneg %p147
        %p262 = pneg %p144
        %p263 = pneg %p168
        %p264 = pneg %p165
        %p265 = pneg %p194
        %p266 = pneg %p191
        %s267 = sand.u32 %s181, 1
        %s268 = scalar_lea.sflag [#allocation3], %s267
        %s269 = sand.u32 %s181, 1
        %s270 = scalar_lea.vmem [#allocation2], %s269
        %p271 = scmp.lt.s32.totalorder %s21, 1
        %s272 = scalar_select %p271, %s21, 1
        %s273 = smul.addr %s272, 28
        %s274 = smul.addr %s273, 4
        %s275 = scalar_lea.vmem %s0, %s274
        %v277 = vld [vmem:[%s275] sm:$0xff]
        %v278 = vld [vmem:[%s275 + $0x8] sm:$0xff]
        %v279 = vld [vmem:[%s275 + $0x10] sm:$0xff]
        %v280 = vld [vmem:[%s275 + $0x18] sm:$0xf]
        %v281 = vld [vmem:[%s275 + $0x1c] sm:$0xff]
        %v282 = vld [vmem:[%s275 + $0x24] sm:$0xff]
        %v283 = vld [vmem:[%s275 + $0x2c] sm:$0xff]
        %v284 = vld [vmem:[%s275 + $0x34] sm:$0xf]
        %v285 = vld [vmem:[%s275 + $0x38] sm:$0xff]
        %v286 = vld [vmem:[%s275 + $0x40] sm:$0xff]
        %v287 = vld [vmem:[%s275 + $0x48] sm:$0xff]
        %v288 = vld [vmem:[%s275 + $0x50] sm:$0xf]
        %v289 = vld [vmem:[%s275 + $0x54] sm:$0x11]
        %v290 = vld [vmem:[%s275 + $0x5c] sm:$0x11]
        %v291 = vld [vmem:[%s275 + $0x64] sm:$0x11]
        %v292 = vld [vmem:[%s275 + $0x6c] sm:$0x1]
        %v293 = vld [vmem:[%s1] sm:$0xf]
        %v294 = vld [vmem:[%s1 + $0x4] sm:$0xf]
        %v295 = vld [vmem:[%s1 + $0x8] sm:$0xf]
        %v296 = vld [vmem:[%s1 + $0xc] sm:$0xf]
        %v297 = vld [vmem:[%s1 + $0x10] sm:$0xf]
        %v298 = vld [vmem:[%s1 + $0x14] sm:$0xf]
        %v299 = vld [vmem:[%s1 + $0x18] sm:$0xf]
        %v300 = vld [vmem:[%s1 + $0x1c] sm:$0xf]
        %v301 = vld [vmem:[%s1 + $0x20] sm:$0xf]
        %v302 = vld [vmem:[%s1 + $0x24] sm:$0xf]
        %v303 = vld [vmem:[%s1 + $0x28] sm:$0xf]
        %v304 = vld [vmem:[%s1 + $0x2c] sm:$0xf]
        %v305 = vld [vmem:[%s1 + $0x30] sm:$0xf]
        %v306 = vld [vmem:[%s1 + $0x34] sm:$0xf]
        %v307 = vld [vmem:[%s1 + $0x38] sm:$0xf]
        %v308 = vld [vmem:[%s1 + $0x3c] sm:$0xf]
        %v309 = vld [vmem:[%s1 + $0x40] sm:$0xf]
        %v310 = vld [vmem:[%s1 + $0x44] sm:$0xf]
        %v311 = vld [vmem:[%s1 + $0x48] sm:$0xf]
        %v312 = vld [vmem:[%s1 + $0x4c] sm:$0xf]
        %v313 = vld [vmem:[%s1 + $0x50] sm:$0xf]
        %v314 = vld [vmem:[%s1 + $0x54] sm:$0xf]
        %v315 = vld [vmem:[%s1 + $0x58] sm:$0xf]
        %v316 = vld [vmem:[%s1 + $0x5c] sm:$0xf]
        %v317 = vld [vmem:[%s1 + $0x60] sm:$0xf]
        %v318 = vld [vmem:[%s1 + $0x64] sm:$0xf]
        %v319 = vld [vmem:[%s1 + $0x68] sm:$0xf]
        %v320 = vld [vmem:[%s1 + $0x6c] sm:$0xf]
        %v321 = vld [vmem:[%s1 + $0x70] sm:$0xf]
        %v322 = vld [vmem:[%s1 + $0x74] sm:$0xf]
        %v323 = vld [vmem:[%s1 + $0x78] sm:$0xf]
        %v324 = vld [vmem:[%s1 + $0x7c] sm:$0xf]
        %v325 = vld [vmem:[%s1 + $0x80] sm:$0xf]
        %v326 = vld [vmem:[%s1 + $0x84] sm:$0xf]
        %v327 = vld [vmem:[%s1 + $0x88] sm:$0xf]
        %v328 = vld [vmem:[%s1 + $0x8c] sm:$0xf]
        %v329 = vld [vmem:[%s1 + $0x90] sm:$0xf]
        %v330 = vld [vmem:[%s1 + $0x94] sm:$0xf]
        %v331 = vld [vmem:[%s1 + $0x98] sm:$0xf]
        %v332 = vld [vmem:[%s1 + $0x9c] sm:$0xf]
        %v333 = vld [vmem:[%s1 + $0xa0] sm:$0xf]
        %v334 = vld [vmem:[%s1 + $0xa4] sm:$0xf]
        %v335 = vld [vmem:[%s1 + $0xa8] sm:$0xf]
        %v336 = vld [vmem:[%s1 + $0xac] sm:$0xf]
        %v337 = vld [vmem:[%s1 + $0xb0] sm:$0xf]
        %v338 = vld [vmem:[%s1 + $0xb4] sm:$0xf]
        %v339 = vld [vmem:[%s1 + $0xb8] sm:$0xf]
        %v340 = vld [vmem:[%s1 + $0xbc] sm:$0xf]
        %v341 = vld [vmem:[%s1 + $0xc0] sm:$0xf]
        %v342 = vld [vmem:[%s1 + $0xc4] sm:$0xf]
        %v343 = vld [vmem:[%s1 + $0xc8] sm:$0xf]
        %v344 = vld [vmem:[%s1 + $0xcc] sm:$0xf]
        %v345 = vld [vmem:[%s1 + $0xd0] sm:$0xf]
        %v346 = vld [vmem:[%s1 + $0xd4] sm:$0xf]
        %v347 = vld [vmem:[%s1 + $0xd8] sm:$0xf]
        %v348 = vld [vmem:[%s1 + $0xdc] sm:$0xf]
        %v349 = vld [vmem:[%s1 + $0xe0] sm:$0xf]
        %v350 = vld [vmem:[%s1 + $0xe4] sm:$0xf]
        %v351 = vld [vmem:[%s1 + $0xe8] sm:$0xf]
        %v352 = vld [vmem:[%s1 + $0xec] sm:$0xf]
        %v353 = vld [vmem:[%s1 + $0xf0] sm:$0xf]
        %v354 = vld [vmem:[%s1 + $0xf4] sm:$0xf]
        %v355 = vld [vmem:[%s1 + $0xf8] sm:$0xf]
        %v356 = vld [vmem:[%s1 + $0xfc] sm:$0xf]
        %v357 = vld [vmem:[%s1 + $0x100] sm:$0xf]
        %v358 = vld [vmem:[%s1 + $0x104] sm:$0xf]
        %v359 = vld [vmem:[%s1 + $0x108] sm:$0xf]
        %v360 = vld [vmem:[%s1 + $0x10c] sm:$0xf]
        %v361 = vld [vmem:[%s1 + $0x110] sm:$0xf]
        %v362 = vld [vmem:[%s1 + $0x114] sm:$0xf]
        %v363 = vld [vmem:[%s1 + $0x118] sm:$0xf]
        %v364 = vld [vmem:[%s1 + $0x11c] sm:$0xf]
        %v365 = vld [vmem:[%s1 + $0x120] sm:$0xf]
        %v366 = vld [vmem:[%s1 + $0x124] sm:$0xf]
        %v367 = vld [vmem:[%s1 + $0x128] sm:$0xf]
        %v368 = vld [vmem:[%s1 + $0x12c] sm:$0xf]
        %v369 = vld [vmem:[%s1 + $0x130] sm:$0xf]
        %v370 = vld [vmem:[%s1 + $0x134] sm:$0xf]
        %v371 = vld [vmem:[%s1 + $0x138] sm:$0xf]
        %v372 = vld [vmem:[%s1 + $0x13c] sm:$0xf]
        %v373 = vld [vmem:[%s1 + $0x140] sm:$0xf]
        %v374 = vld [vmem:[%s1 + $0x144] sm:$0xf]
        %v375 = vld [vmem:[%s1 + $0x148] sm:$0xf]
        %v376 = vld [vmem:[%s1 + $0x14c] sm:$0xf]
        %v377 = vld [vmem:[%s1 + $0x150] sm:$0xf]
        %v378 = vld [vmem:[%s1 + $0x154] sm:$0xf]
        %v379 = vld [vmem:[%s1 + $0x158] sm:$0xf]
        %v380 = vld [vmem:[%s1 + $0x15c] sm:$0xf]
        %v381 = vld [vmem:[%s1 + $0x160] sm:$0xf]
        %v382 = vld [vmem:[%s1 + $0x164] sm:$0xf]
        %v383 = vld [vmem:[%s1 + $0x168] sm:$0xf]
        %v384 = vld [vmem:[%s1 + $0x16c] sm:$0xf]
        %v385 = vld [vmem:[%s1 + $0x170] sm:$0xf]
        %v386 = vld [vmem:[%s1 + $0x174] sm:$0xf]
        %v387 = vld [vmem:[%s1 + $0x178] sm:$0xf]
        %v388 = vld [vmem:[%s1 + $0x17c] sm:$0xf]
        %v389 = vld [vmem:[%s1 + $0x180] sm:$0xf]
        %v390 = vld [vmem:[%s1 + $0x184] sm:$0xf]
        %v391 = vld [vmem:[%s1 + $0x188] sm:$0xf]
        %v392 = vld [vmem:[%s1 + $0x18c] sm:$0xf]
        %v393 = vld [vmem:[%s2] sm:$0x1]
        %v395 = vlaneseq
        %v396 = vshrl.u32 %v395, 7
        %v397 = vsub.s32 0, %v396
        %v398 = vrot.slane %v393, %v397
        %v416 = vunpack.c.l.b16 %v277
        %v417 = vunpack.c.h.b16 %v277
        %v418 = vunpack.c.l.b16 %v278
        %v419 = vunpack.c.h.b16 %v278
        %v420 = vunpack.c.l.b16 %v279
        %v421 = vunpack.c.h.b16 %v279
        %v422 = vunpack.c.l.b16 %v280
        %v423 = vunpack.c.l.b16 %v281
        %v424 = vunpack.c.h.b16 %v281
        %v425 = vunpack.c.l.b16 %v282
        %v426 = vunpack.c.h.b16 %v282
        %v427 = vunpack.c.l.b16 %v283
        %v428 = vunpack.c.h.b16 %v283
        %v429 = vunpack.c.l.b16 %v284
        %v430 = vunpack.c.l.b16 %v285
        %v431 = vunpack.c.h.b16 %v285
        %v432 = vunpack.c.l.b16 %v286
        %v433 = vunpack.c.h.b16 %v286
        %v434 = vunpack.c.l.b16 %v287
        %v435 = vunpack.c.h.b16 %v287
        %v436 = vunpack.c.l.b16 %v288
        %v437 = vunpack.c.l.b16 %v289
        %v438 = vunpack.c.h.b16 %v289
        %v439 = vunpack.c.l.b16 %v290
        %v440 = vunpack.c.h.b16 %v290
        %v441 = vunpack.c.l.b16 %v291
        %v442 = vunpack.c.h.b16 %v291
        %v443 = vunpack.c.l.b16 %v292
        %v444 = vpack.c.b16 %v423, %v416
        %v445 = vpack.c.b16 %v424, %v417
        %v446 = vpack.c.b16 %v425, %v418
        %v447 = vpack.c.b16 %v426, %v419
        %v448 = vpack.c.b16 %v427, %v420
        %v449 = vpack.c.b16 %v428, %v421
        %v450 = vpack.c.b16 %v429, %v422
        %v451 = vpack.c.b16 %v437, %v430
        %v452 = vpack.c.b16 %v438, %v431
        %v453 = vpack.c.b16 %v439, %v432
        %v454 = vpack.c.b16 %v440, %v433
        %v455 = vpack.c.b16 %v441, %v434
        %v456 = vpack.c.b16 %v442, %v435
        %v457 = vpack.c.b16 %v443, %v436
        %v570 = vunpack.c.l.b16 %v293
        %v571 = vunpack.c.l.b16 %v294
        %v572 = vunpack.c.l.b16 %v295
        %v573 = vunpack.c.l.b16 %v296
        %v574 = vunpack.c.l.b16 %v297
        %v575 = vunpack.c.l.b16 %v298
        %v576 = vunpack.c.l.b16 %v299
        %v577 = vunpack.c.l.b16 %v300
        %v578 = vunpack.c.l.b16 %v301
        %v579 = vunpack.c.l.b16 %v302
        %v580 = vunpack.c.l.b16 %v303
        %v581 = vunpack.c.l.b16 %v304
        %v582 = vunpack.c.l.b16 %v305
        %v583 = vunpack.c.l.b16 %v306
        %v584 = vunpack.c.l.b16 %v307
        %v585 = vunpack.c.l.b16 %v308
        %v586 = vunpack.c.l.b16 %v309
        %v587 = vunpack.c.l.b16 %v310
        %v588 = vunpack.c.l.b16 %v311
        %v589 = vunpack.c.l.b16 %v312
        %v590 = vunpack.c.l.b16 %v313
        %v591 = vunpack.c.l.b16 %v314
        %v592 = vunpack.c.l.b16 %v315
        %v593 = vunpack.c.l.b16 %v316
        %v594 = vunpack.c.l.b16 %v317
        %v595 = vunpack.c.l.b16 %v318
        %v596 = vunpack.c.l.b16 %v319
        %v597 = vunpack.c.l.b16 %v320
        %v598 = vunpack.c.l.b16 %v321
        %v599 = vunpack.c.l.b16 %v322
        %v600 = vunpack.c.l.b16 %v323
        %v601 = vunpack.c.l.b16 %v324
        %v602 = vunpack.c.l.b16 %v325
        %v603 = vunpack.c.l.b16 %v326
        %v604 = vunpack.c.l.b16 %v327
        %v605 = vunpack.c.l.b16 %v328
        %v606 = vunpack.c.l.b16 %v329
        %v607 = vunpack.c.l.b16 %v330
        %v608 = vunpack.c.l.b16 %v331
        %v609 = vunpack.c.l.b16 %v332
        %v610 = vunpack.c.l.b16 %v333
        %v611 = vunpack.c.l.b16 %v334
        %v612 = vunpack.c.l.b16 %v335
        %v613 = vunpack.c.l.b16 %v336
        %v614 = vunpack.c.l.b16 %v337
        %v615 = vunpack.c.l.b16 %v338
        %v616 = vunpack.c.l.b16 %v339
        %v617 = vunpack.c.l.b16 %v340
        %v618 = vunpack.c.l.b16 %v341
        %v619 = vunpack.c.l.b16 %v342
        %v620 = vunpack.c.l.b16 %v343
        %v621 = vunpack.c.l.b16 %v344
        %v622 = vunpack.c.l.b16 %v345
        %v623 = vunpack.c.l.b16 %v346
        %v624 = vunpack.c.l.b16 %v347
        %v625 = vunpack.c.l.b16 %v348
        %v626 = vunpack.c.l.b16 %v349
        %v627 = vunpack.c.l.b16 %v350
        %v628 = vunpack.c.l.b16 %v351
        %v629 = vunpack.c.l.b16 %v352
        %v630 = vunpack.c.l.b16 %v353
        %v631 = vunpack.c.l.b16 %v354
        %v632 = vunpack.c.l.b16 %v355
        %v633 = vunpack.c.l.b16 %v356
        %v634 = vunpack.c.l.b16 %v357
        %v635 = vunpack.c.l.b16 %v358
        %v636 = vunpack.c.l.b16 %v359
        %v637 = vunpack.c.l.b16 %v360
        %v638 = vunpack.c.l.b16 %v361
        %v639 = vunpack.c.l.b16 %v362
        %v640 = vunpack.c.l.b16 %v363
        %v641 = vunpack.c.l.b16 %v364
        %v642 = vunpack.c.l.b16 %v365
        %v643 = vunpack.c.l.b16 %v366
        %v644 = vunpack.c.l.b16 %v367
        %v645 = vunpack.c.l.b16 %v368
        %v646 = vunpack.c.l.b16 %v369
        %v647 = vunpack.c.l.b16 %v370
        %v648 = vunpack.c.l.b16 %v371
        %v649 = vunpack.c.l.b16 %v372
        %v650 = vunpack.c.l.b16 %v373
        %v651 = vunpack.c.l.b16 %v374
        %v652 = vunpack.c.l.b16 %v375
        %v653 = vunpack.c.l.b16 %v376
        %v654 = vunpack.c.l.b16 %v377
        %v655 = vunpack.c.l.b16 %v378
        %v656 = vunpack.c.l.b16 %v379
        %v657 = vunpack.c.l.b16 %v380
        %v658 = vunpack.c.l.b16 %v381
        %v659 = vunpack.c.l.b16 %v382
        %v660 = vunpack.c.l.b16 %v383
        %v661 = vunpack.c.l.b16 %v384
        %v662 = vunpack.c.l.b16 %v385
        %v663 = vunpack.c.l.b16 %v386
        %v664 = vunpack.c.l.b16 %v387
        %v665 = vunpack.c.l.b16 %v388
        %v666 = vunpack.c.l.b16 %v389
        %v667 = vunpack.c.l.b16 %v390
        %v668 = vunpack.c.l.b16 %v391
        %v669 = vunpack.c.l.b16 %v392
        %v670 = vpack.c.b16 %v571, %v570
        %v671 = vpack.c.b16 %v573, %v572
        %v672 = vpack.c.b16 %v575, %v574
        %v673 = vpack.c.b16 %v577, %v576
        %v674 = vpack.c.b16 %v579, %v578
        %v675 = vpack.c.b16 %v581, %v580
        %v676 = vpack.c.b16 %v583, %v582
        %v677 = vpack.c.b16 %v585, %v584
        %v678 = vpack.c.b16 %v587, %v586
        %v679 = vpack.c.b16 %v589, %v588
        %v680 = vpack.c.b16 %v591, %v590
        %v681 = vpack.c.b16 %v593, %v592
        %v682 = vpack.c.b16 %v595, %v594
        %v683 = vpack.c.b16 %v597, %v596
        %v684 = vpack.c.b16 %v599, %v598
        %v685 = vpack.c.b16 %v601, %v600
        %v686 = vpack.c.b16 %v603, %v602
        %v687 = vpack.c.b16 %v605, %v604
        %v688 = vpack.c.b16 %v607, %v606
        %v689 = vpack.c.b16 %v609, %v608
        %v690 = vpack.c.b16 %v611, %v610
        %v691 = vpack.c.b16 %v613, %v612
        %v692 = vpack.c.b16 %v615, %v614
        %v693 = vpack.c.b16 %v617, %v616
        %v694 = vpack.c.b16 %v619, %v618
        %v695 = vpack.c.b16 %v621, %v620
        %v696 = vpack.c.b16 %v623, %v622
        %v697 = vpack.c.b16 %v625, %v624
        %v698 = vpack.c.b16 %v627, %v626
        %v699 = vpack.c.b16 %v629, %v628
        %v700 = vpack.c.b16 %v631, %v630
        %v701 = vpack.c.b16 %v633, %v632
        %v702 = vpack.c.b16 %v635, %v634
        %v703 = vpack.c.b16 %v637, %v636
        %v704 = vpack.c.b16 %v639, %v638
        %v705 = vpack.c.b16 %v641, %v640
        %v706 = vpack.c.b16 %v643, %v642
        %v707 = vpack.c.b16 %v645, %v644
        %v708 = vpack.c.b16 %v647, %v646
        %v709 = vpack.c.b16 %v649, %v648
        %v710 = vpack.c.b16 %v651, %v650
        %v711 = vpack.c.b16 %v653, %v652
        %v712 = vpack.c.b16 %v655, %v654
        %v713 = vpack.c.b16 %v657, %v656
        %v714 = vpack.c.b16 %v659, %v658
        %v715 = vpack.c.b16 %v661, %v660
        %v716 = vpack.c.b16 %v663, %v662
        %v717 = vpack.c.b16 %v665, %v664
        %v718 = vpack.c.b16 %v667, %v666
        %v719 = vpack.c.b16 %v669, %v668
        %vm770 = vcmask 261120
        %v772 = vsel %vm770, %v450, 0
        %v775 = vsel %vm770, %v457, 0
        %777 = vmatprep.subr.bf16.mxu0 0
        %778 = vmatpush1.bf16.msra.mxu0 %v670
        %779 = vmatprep.subr.bf16.mxu0 0
        %780 = vmatpush1.bf16.msra.mxu0 %v671
        %781 = vmatprep.subr.bf16.mxu0 0
        %782 = vmatpush1.bf16.msra.mxu0 %v672
        %783 = vmatprep.subr.bf16.mxu0 0
        %784 = vmatpush1.bf16.msra.mxu0 %v673
        %785 = vmatprep.subr.bf16.mxu0 0
        %786 = vmatpush1.bf16.msra.mxu0 %v674
        %787 = vmatprep.subr.bf16.mxu0 0
        %788 = vmatpush1.bf16.msra.mxu0 %v675
        %789 = vmatprep.subr.bf16.mxu0 0
        %790 = vmatpush1.bf16.msra.mxu0 %v676
        %791 = vmatprep.subr.bf16.mxu0 0
        %792 = vmatpush1.bf16.msra.mxu0 %v677
        %793 = vmatprep.subr.bf16.mxu0 0
        %794 = vmatpush1.bf16.msra.mxu0 %v678
        %795 = vmatprep.subr.bf16.mxu0 0
        %796 = vmatpush1.bf16.msra.mxu0 %v679
        %797 = vmatprep.subr.bf16.mxu0 0
        %798 = vmatpush1.bf16.msra.mxu0 %v680
        %799 = vmatprep.subr.bf16.mxu0 0
        %800 = vmatpush1.bf16.msra.mxu0 %v681
        %801 = vmatprep.subr.bf16.mxu0 0
        %802 = vmatpush1.bf16.msra.mxu0 %v682
        %803 = vmatprep.subr.bf16.mxu0 0
        %804 = vmatpush1.bf16.msra.mxu0 %v683
        %805 = vmatprep.subr.bf16.mxu0 0
        %806 = vmatpush1.bf16.msra.mxu0 %v684
        %807 = vmatprep.subr.bf16.mxu0 0
        %808 = vmatpush1.bf16.msra.mxu0 %v685
        %809 = vmatprep.mubr.bf16.mxu0 %v445
        %810 = vmatmul.mubr.bf16.gmra.mrb[0].mxu0 %v444
        %v811 = vpop.f32.mrb[0].mxu0
        %v812 = vadd.f32 %v398, %v811
        %v813 = vpop.f32.mrb[0].mxu0
        %v814 = vpop.f32.mrb[0].mxu0
        %v815 = vadd.f32 %v398, %v814
        %v816 = vpop.f32.mrb[0].mxu0
        %817 = vmatprep.mubr.bf16.mxu0 %v452
        %818 = vmatmul.mubr.bf16.gmra.mrb[0].mxu0 %v451
        %v819 = vpop.f32.mrb[0].mxu0
        %v820 = vadd.f32 %v398, %v819
        %v821 = vpop.f32.mrb[0].mxu0
        %v822 = vpop.f32.mrb[0].mxu0
        %v823 = vadd.f32 %v398, %v822
        %v824 = vpop.f32.mrb[0].mxu0
        %825 = vdwg.mxu0
        %826 = vmatprep.subr.bf16.mxu0 0
        %827 = vmatpush1.bf16.msra.mxu0 %v686
        %828 = vmatprep.subr.bf16.mxu0 0
        %829 = vmatpush1.bf16.msra.mxu0 %v687
        %830 = vmatprep.subr.bf16.mxu0 0
        %831 = vmatpush1.bf16.msra.mxu0 %v688
        %832 = vmatprep.subr.bf16.mxu0 0
        %833 = vmatpush1.bf16.msra.mxu0 %v689
        %834 = vmatprep.subr.bf16.mxu0 0
        %835 = vmatpush1.bf16.msra.mxu0 %v690
        %836 = vmatprep.subr.bf16.mxu0 0
        %837 = vmatpush1.bf16.msra.mxu0 %v691
        %838 = vmatprep.subr.bf16.mxu0 0
        %839 = vmatpush1.bf16.msra.mxu0 %v692
        %840 = vmatprep.subr.bf16.mxu0 0
        %841 = vmatpush1.bf16.msra.mxu0 %v693
        %842 = vmatprep.subr.bf16.mxu0 0
        %843 = vmatpush1.bf16.msra.mxu0 %v694
        %844 = vmatprep.subr.bf16.mxu0 0
        %845 = vmatpush1.bf16.msra.mxu0 %v695
        %846 = vmatprep.subr.bf16.mxu0 0
        %847 = vmatpush1.bf16.msra.mxu0 %v696
        %848 = vmatprep.subr.bf16.mxu0 0
        %849 = vmatpush1.bf16.msra.mxu0 %v697
        %850 = vmatprep.subr.bf16.mxu0 0
        %851 = vmatpush1.bf16.msra.mxu0 %v698
        %852 = vmatprep.subr.bf16.mxu0 0
        %853 = vmatpush1.bf16.msra.mxu0 %v699
        %854 = vmatprep.subr.bf16.mxu0 0
        %855 = vmatpush1.bf16.msra.mxu0 %v700
        %856 = vmatprep.subr.bf16.mxu0 0
        %857 = vmatpush1.bf16.msra.mxu0 %v701
        %858 = vmatprep.mubr.bf16.mxu0 %v447
        %859 = vmatmul.mubr.bf16.gmra.mrb[0].mxu0 %v446
        %v860 = vpop.f32.mrb[0].mxu0
        %v861 = vadd.f32 %v812, %v860
        %v862 = vpop.f32.mrb[0].mxu0
        %v863 = vpop.f32.mrb[0].mxu0
        %v864 = vadd.f32 %v815, %v863
        %v865 = vpop.f32.mrb[0].mxu0
        %866 = vmatprep.mubr.bf16.mxu0 %v454
        %867 = vmatmul.mubr.bf16.gmra.mrb[0].mxu0 %v453
        %v868 = vpop.f32.mrb[0].mxu0
        %v869 = vadd.f32 %v820, %v868
        %v870 = vpop.f32.mrb[0].mxu0
        %v871 = vpop.f32.mrb[0].mxu0
        %v872 = vadd.f32 %v823, %v871
        %v873 = vpop.f32.mrb[0].mxu0
        %874 = vdwg.mxu0
        %875 = vmatprep.subr.bf16.mxu0 0
        %876 = vmatpush1.bf16.msra.mxu0 %v702
        %877 = vmatprep.subr.bf16.mxu0 0
        %878 = vmatpush1.bf16.msra.mxu0 %v703
        %879 = vmatprep.subr.bf16.mxu0 0
        %880 = vmatpush1.bf16.msra.mxu0 %v704
        %881 = vmatprep.subr.bf16.mxu0 0
        %882 = vmatpush1.bf16.msra.mxu0 %v705
        %883 = vmatprep.subr.bf16.mxu0 0
        %884 = vmatpush1.bf16.msra.mxu0 %v706
        %885 = vmatprep.subr.bf16.mxu0 0
        %886 = vmatpush1.bf16.msra.mxu0 %v707
        %887 = vmatprep.subr.bf16.mxu0 0
        %888 = vmatpush1.bf16.msra.mxu0 %v708
        %889 = vmatprep.subr.bf16.mxu0 0
        %890 = vmatpush1.bf16.msra.mxu0 %v709
        %891 = vmatprep.subr.bf16.mxu0 0
        %892 = vmatpush1.bf16.msra.mxu0 %v710
        %893 = vmatprep.subr.bf16.mxu0 0
        %894 = vmatpush1.bf16.msra.mxu0 %v711
        %895 = vmatprep.subr.bf16.mxu0 0
        %896 = vmatpush1.bf16.msra.mxu0 %v712
        %897 = vmatprep.subr.bf16.mxu0 0
        %898 = vmatpush1.bf16.msra.mxu0 %v713
        %899 = vmatprep.subr.bf16.mxu0 0
        %900 = vmatpush1.bf16.msra.mxu0 %v714
        %901 = vmatprep.subr.bf16.mxu0 0
        %902 = vmatpush1.bf16.msra.mxu0 %v715
        %903 = vmatprep.subr.bf16.mxu0 0
        %904 = vmatpush1.bf16.msra.mxu0 %v716
        %905 = vmatprep.subr.bf16.mxu0 0
        %906 = vmatpush1.bf16.msra.mxu0 %v717
        %907 = vmatprep.mubr.bf16.mxu0 %v449
        %908 = vmatmul.mubr.bf16.gmra.mrb[0].mxu0 %v448
        %v909 = vpop.f32.mrb[0].mxu0
        %v910 = vadd.f32 %v861, %v909
        %v911 = vpop.f32.mrb[0].mxu0
        %v912 = vpop.f32.mrb[0].mxu0
        %v913 = vadd.f32 %v864, %v912
        %v914 = vpop.f32.mrb[0].mxu0
        %915 = vmatprep.mubr.bf16.mxu0 %v456
        %916 = vmatmul.mubr.bf16.gmra.mrb[0].mxu0 %v455
        %v917 = vpop.f32.mrb[0].mxu0
        %v918 = vadd.f32 %v869, %v917
        %v919 = vpop.f32.mrb[0].mxu0
        %v920 = vpop.f32.mrb[0].mxu0
        %v921 = vadd.f32 %v872, %v920
        %v922 = vpop.f32.mrb[0].mxu0
        %923 = vdwg.mxu0
        %924 = vmatprep.subr.bf16.mxu0 0
        %925 = vmatpush1.bf16.msra.mxu0 %v718
        %926 = vmatprep.subr.bf16.mxu0 0
        %927 = vmatpush1.bf16.msra.mxu0 %v719
        %928 = vmatprep.subr.bf16.mxu0 0
        %929 = vmatpush1.bf16.msra.mxu0 0
        %930 = vmatprep.subr.bf16.mxu0 0
        %931 = vmatpush1.bf16.msra.mxu0 0
        %932 = vmatprep.subr.bf16.mxu0 0
        %933 = vmatpush1.bf16.msra.mxu0 0
        %934 = vmatprep.subr.bf16.mxu0 0
        %935 = vmatpush1.bf16.msra.mxu0 0
        %936 = vmatprep.subr.bf16.mxu0 0
        %937 = vmatpush1.bf16.msra.mxu0 0
        %938 = vmatprep.subr.bf16.mxu0 0
        %939 = vmatpush1.bf16.msra.mxu0 0
        %940 = vmatprep.subr.bf16.mxu0 0
        %941 = vmatpush1.bf16.msra.mxu0 0
        %942 = vmatprep.subr.bf16.mxu0 0
        %943 = vmatpush1.bf16.msra.mxu0 0
        %944 = vmatprep.subr.bf16.mxu0 0
        %945 = vmatpush1.bf16.msra.mxu0 0
        %946 = vmatprep.subr.bf16.mxu0 0
        %947 = vmatpush1.bf16.msra.mxu0 0
        %948 = vmatprep.subr.bf16.mxu0 0
        %949 = vmatpush1.bf16.msra.mxu0 0
        %950 = vmatprep.subr.bf16.mxu0 0
        %951 = vmatpush1.bf16.msra.mxu0 0
        %952 = vmatprep.subr.bf16.mxu0 0
        %953 = vmatpush1.bf16.msra.mxu0 0
        %954 = vmatprep.subr.bf16.mxu0 0
        %955 = vmatpush1.bf16.msra.mxu0 0
        %956 = vmatprep.mubr.bf16.mxu0 0
        %957 = vmatmul.mubr.bf16.gmra.mrb[0].mxu0 %v772
        %v958 = vpop.f32.mrb[0].mxu0
        %v959 = vadd.f32 %v910, %v958
        %v960 = vpop.f32.mrb[0].mxu0
        %v961 = vpop.f32.mrb[0].mxu0
        %v962 = vadd.f32 %v913, %v961
        %v963 = vpop.f32.mrb[0].mxu0
        %964 = vmatprep.mubr.bf16.mxu0 0
        %965 = vmatmul.mubr.bf16.gmra.mrb[0].mxu0 %v775
        %v966 = vpop.f32.mrb[0].mxu0
        %v967 = vadd.f32 %v918, %v966
        %v968 = vpop.f32.mrb[0].mxu0
        %v969 = vpop.f32.mrb[0].mxu0
        %v970 = vadd.f32 %v921, %v969
        %v971 = vpop.f32.mrb[0].mxu0
        %972 = vdwg.mxu0
        %v973 = vmax.f32 %v959, 0.0
        %v974 = vmax.f32 %v962, 0.0
        %v975 = vmax.f32 %v967, 0.0
        %v976 = vmax.f32 %v970, 0.0
        %v977 = vadd.f32 %v973, %v974
        %v978 = vadd.f32 %v977, %v975
        %vm979 = vcmask 1040384
        %v980 = vsel %vm979, %v976, 0.0
        %v981 = vadd.f32 %v978, %v980
        %v982 = vrot.slane %v981, 4
        %v983 = vadd.f32 %v981, %v982
        %v984 = vrot.slane %v983, 2
        %v985 = vadd.f32 %v983, %v984
        %v986 = vrot.slane %v985, 1
        %v987 = vadd.f32 %v985, %v986
        %v988 = vrcp.pop 25.0
        %v989 = vmul.f32 %v987, %v988
        %v990 = vld [vmem:[%s3] sm:$0xff]
        %v991 = vld [vmem:[%s3 + $0x8] sm:$0xff]
        %v992 = vld [vmem:[%s3 + $0x10] sm:$0xff]
        %v993 = vld [vmem:[%s3 + $0x18] sm:$0xff]
        %v994 = vld [vmem:[%s3 + $0x20] sm:$0xff]
        %v995 = vld [vmem:[%s3 + $0x28] sm:$0xff]
        %v996 = vld [vmem:[%s3 + $0x30] sm:$0xff]
        %v997 = vld [vmem:[%s3 + $0x38] sm:$0xff]
        %v998 = vld [vmem:[%s3 + $0x40] sm:$0xff]
        %v999 = vld [vmem:[%s3 + $0x48] sm:$0xff]
        %v1000 = vld [vmem:[%s3 + $0x50] sm:$0xff]
        %v1001 = vld [vmem:[%s3 + $0x58] sm:$0xff]
        %v1002 = vld [vmem:[%s3 + $0x60] sm:$0xff]
        %v1003 = vld [vmem:[%s3 + $0x68] sm:$0xff]
        %v1004 = vld [vmem:[%s3 + $0x70] sm:$0xff]
        %v1005 = vld [vmem:[%s3 + $0x78] sm:$0xff]
        %v1006 = vld [vmem:[%s4] sm:$0x1]
        %1007 = vmatprep.subr.mxu0 0.0
        %1008 = vmatpush1.msra.mxu0 %v990
        %1009 = vmatprep.subr.mxu0 0.0
        %1010 = vmatpush1.msra.mxu0 %v991
        %1011 = vmatprep.subr.mxu0 0.0
        %1012 = vmatpush1.msra.mxu0 %v992
        %1013 = vmatprep.subr.mxu0 0.0
        %1014 = vmatpush1.msra.mxu0 %v993
        %1015 = vmatprep.subr.mxu0 0.0
        %1016 = vmatpush1.msra.mxu0 %v994
        %1017 = vmatprep.subr.mxu0 0.0
        %1018 = vmatpush1.msra.mxu0 %v995
        %1019 = vmatprep.subr.mxu0 0.0
        %1020 = vmatpush1.msra.mxu0 %v996
        %1021 = vmatprep.subr.mxu0 0.0
        %1022 = vmatpush1.msra.mxu0 %v997
        %1023 = vmatprep.subr.mxu0 0.0
        %1024 = vmatpush1.msra.mxu0 %v998
        %1025 = vmatprep.subr.mxu0 0.0
        %1026 = vmatpush1.msra.mxu0 %v999
        %1027 = vmatprep.subr.mxu0 0.0
        %1028 = vmatpush1.msra.mxu0 %v1000
        %1029 = vmatprep.subr.mxu0 0.0
        %1030 = vmatpush1.msra.mxu0 %v1001
        %1031 = vmatprep.subr.mxu0 0.0
        %1032 = vmatpush1.msra.mxu0 %v1002
        %1033 = vmatprep.subr.mxu0 0.0
        %1034 = vmatpush1.msra.mxu0 %v1003
        %1035 = vmatprep.subr.mxu0 0.0
        %1036 = vmatpush1.msra.mxu0 %v1004
        %1037 = vmatprep.subr.mxu0 0.0
        %1038 = vmatpush1.msra.mxu0 %v1005
        %1039 = vmatprep.subr.mxu0 0.0
        %1040 = vmatpush1.msra.mxu0 0.0
        %1041 = vmatprep.subr.mxu0 0.0
        %1042 = vmatpush1.msra.mxu0 0.0
        %1043 = vmatprep.subr.mxu0 0.0
        %1044 = vmatpush1.msra.mxu0 0.0
        %1045 = vmatprep.subr.mxu0 0.0
        %1046 = vmatpush1.msra.mxu0 0.0
        %1047 = vmatprep.subr.mxu0 0.0
        %1048 = vmatpush1.msra.mxu0 0.0
        %1049 = vmatprep.subr.mxu0 0.0
        %1050 = vmatpush1.msra.mxu0 0.0
        %1051 = vmatprep.subr.mxu0 0.0
        %1052 = vmatpush1.msra.mxu0 0.0
        %1053 = vmatprep.subr.mxu0 0.0
        %1054 = vmatpush1.msra.mxu0 0.0
        %1055 = vmatprep.subr.mxu0 0.0
        %1056 = vmatpush1.msra.mxu0 0.0
        %1057 = vmatprep.subr.mxu0 0.0
        %1058 = vmatpush1.msra.mxu0 0.0
        %1059 = vmatprep.subr.mxu0 0.0
        %1060 = vmatpush1.msra.mxu0 0.0
        %1061 = vmatprep.subr.mxu0 0.0
        %1062 = vmatpush1.msra.mxu0 0.0
        %1063 = vmatprep.subr.mxu0 0.0
        %1064 = vmatpush1.msra.mxu0 0.0
        %1065 = vmatprep.subr.mxu0 0.0
        %1066 = vmatpush1.msra.mxu0 0.0
        %1067 = vmatprep.subr.mxu0 0.0
        %1068 = vmatpush1.msra.mxu0 0.0
        %1069 = vmatprep.subr.mxu0 0.0
        %1070 = vmatpush1.msra.mxu0 0.0
        %1071 = vmatprep.mubr.f32.mxu0 0.0
        %1072 = vmatmul.mubr.f32.gmra.mrb[0].mxu0 %v989
        %v1073 = vpop.f32.mrb[0].mxu0
        %v1074 = vadd.f32 %v1006, %v1073
        %v1075 = vpop.f32.mrb[0].mxu0
        %1076 = vdwg.mxu0
        %v1077 = vmax.f32 %v1074, 0.0
        %v1078 = vld [vmem:[%s5] sm:$0xff]
        %v1079 = vld [vmem:[%s5 + $0x8] sm:$0xff]
        %v1080 = vld [vmem:[%s5 + $0x10] sm:$0xff]
        %v1081 = vld [vmem:[%s5 + $0x18] sm:$0xff]
        %v1082 = vld [vmem:[%s5 + $0x20] sm:$0xff]
        %v1083 = vld [vmem:[%s5 + $0x28] sm:$0xff]
        %v1084 = vld [vmem:[%s5 + $0x30] sm:$0xff]
        %v1085 = vld [vmem:[%s5 + $0x38] sm:$0xff]
        %v1086 = vld [vmem:[%s5 + $0x40] sm:$0xff]
        %v1087 = vld [vmem:[%s5 + $0x48] sm:$0xff]
        %v1088 = vld [vmem:[%s5 + $0x50] sm:$0xf]
        %v1089 = vld [vmem:[%s6] sm:$0x1]
        %vm1090 = vcmask 687104
        %v1092 = vsel %vm1090, %v1077, 0
        %vm1094 = vcmask 1043456
        %v1096 = vsel %vm1094, %v1088, 0
        %1098 = vmatprep.subr.mxu0 0.0
        %1099 = vmatpush1.msra.mxu0 %v1078
        %1100 = vmatprep.subr.mxu0 0.0
        %1101 = vmatpush1.msra.mxu0 %v1079
        %1102 = vmatprep.subr.mxu0 0.0
        %1103 = vmatpush1.msra.mxu0 %v1080
        %1104 = vmatprep.subr.mxu0 0.0
        %1105 = vmatpush1.msra.mxu0 %v1081
        %1106 = vmatprep.subr.mxu0 0.0
        %1107 = vmatpush1.msra.mxu0 %v1082
        %1108 = vmatprep.subr.mxu0 0.0
        %1109 = vmatpush1.msra.mxu0 %v1083
        %1110 = vmatprep.subr.mxu0 0.0
        %1111 = vmatpush1.msra.mxu0 %v1084
        %1112 = vmatprep.subr.mxu0 0.0
        %1113 = vmatpush1.msra.mxu0 %v1085
        %1114 = vmatprep.subr.mxu0 0.0
        %1115 = vmatpush1.msra.mxu0 %v1086
        %1116 = vmatprep.subr.mxu0 0.0
        %1117 = vmatpush1.msra.mxu0 %v1087
        %1118 = vmatprep.subr.mxu0 0.0
        %1119 = vmatpush1.msra.mxu0 %v1096
        %1120 = vmatprep.subr.mxu0 0.0
        %1121 = vmatpush1.msra.mxu0 0.0
        %1122 = vmatprep.subr.mxu0 0.0
        %1123 = vmatpush1.msra.mxu0 0.0
        %1124 = vmatprep.subr.mxu0 0.0
        %1125 = vmatpush1.msra.mxu0 0.0
        %1126 = vmatprep.subr.mxu0 0.0
        %1127 = vmatpush1.msra.mxu0 0.0
        %1128 = vmatprep.subr.mxu0 0.0
        %1129 = vmatpush1.msra.mxu0 0.0
        %1130 = vmatprep.subr.mxu0 0.0
        %1131 = vmatpush1.msra.mxu0 0.0
        %1132 = vmatprep.subr.mxu0 0.0
        %1133 = vmatpush1.msra.mxu0 0.0
        %1134 = vmatprep.subr.mxu0 0.0
        %1135 = vmatpush1.msra.mxu0 0.0
        %1136 = vmatprep.subr.mxu0 0.0
        %1137 = vmatpush1.msra.mxu0 0.0
        %1138 = vmatprep.subr.mxu0 0.0
        %1139 = vmatpush1.msra.mxu0 0.0
        %1140 = vmatprep.subr.mxu0 0.0
        %1141 = vmatpush1.msra.mxu0 0.0
        %1142 = vmatprep.subr.mxu0 0.0
        %1143 = vmatpush1.msra.mxu0 0.0
        %1144 = vmatprep.subr.mxu0 0.0
        %1145 = vmatpush1.msra.mxu0 0.0
        %1146 = vmatprep.subr.mxu0 0.0
        %1147 = vmatpush1.msra.mxu0 0.0
        %1148 = vmatprep.subr.mxu0 0.0
        %1149 = vmatpush1.msra.mxu0 0.0
        %1150 = vmatprep.subr.mxu0 0.0
        %1151 = vmatpush1.msra.mxu0 0.0
        %1152 = vmatprep.subr.mxu0 0.0
        %1153 = vmatpush1.msra.mxu0 0.0
        %1154 = vmatprep.subr.mxu0 0.0
        %1155 = vmatpush1.msra.mxu0 0.0
        %1156 = vmatprep.subr.mxu0 0.0
        %1157 = vmatpush1.msra.mxu0 0.0
        %1158 = vmatprep.subr.mxu0 0.0
        %1159 = vmatpush1.msra.mxu0 0.0
        %1160 = vmatprep.subr.mxu0 0.0
        %1161 = vmatpush1.msra.mxu0 0.0
        %1162 = vmatprep.mubr.f32.mxu0 0.0
        %1163 = vmatmul.mubr.f32.gmra.mrb[0].mxu0 %v1092
        %v1164 = vpop.f32.mrb[0].mxu0
        %v1165 = vadd.f32 %v1089, %v1164
        %v1166 = vpop.f32.mrb[0].mxu0
        %1167 = vdwg.mxu0
        %vm1168 = vcmask 73728
        %1169 = vst.msk [vmem:[%s270] sm:$0x1] %vm1168, %v1165
        %s1170 = sand.u32 %s181, 1
        %s1171 = scalar_lea.sflag [#allocation3], %s1170
        %s1172 = sand.u32 %s181, 1
        %s1173 = scalar_lea.vmem [#allocation2], %s1172
        // Predicated region
        $region49: #{snet_cifar_forward.3} parent=47 // pred_check
          %p1174 = pneg %p191
        $region50: #{snet_cifar_forward.3} parent=47 // pred_check_branch
          %1176 = sbr.rel (%p1174) target = $region52
        $region51: #{snet_cifar_forward.3} parent=47 // pred_region
          %s1178 = ssub.s32 16, 16
          %1179 = vsyncadd %s1171, %s1178
          %s1180 = smul.addr %s21, 16
          %s1181 = scalar_lea.hbm %s7, %s1180
          %s1183 = sshll.u32 %s1173, 4
          %s1184 = int_to_ptr.vmem [resolvable:$true] %s1183
          %1186 = dma.vmem_to_hbm [thread:$0]  %s1184, 16, %s1181, %s1171
        $region52: #{snet_cifar_forward.3} parent=47 // pred_fallthru
          _
      $region48: #{snet_cifar_forward.3} parent=5 // pred_fallthru
        _
      %p1187 = scmp.le.s32.totalorder 2, %s16
      // Predicated region
      $region53: #{snet_cifar_forward.3} parent=5 // pred_check
        %p1188 = pneg %p1187
      $region54: #{snet_cifar_forward.3} parent=5 // pred_check_branch
        %1190 = sbr.rel (%p1188) target = $region56
      $region55: #{snet_cifar_forward.3} parent=5 // pred_region
        %s1191 = ssub.s32 %s16, 2
        // Predicated region
        $region57: #{snet_cifar_forward.3} parent=55 // pred_check
          %p1192 = pneg %p197
        $region58: #{snet_cifar_forward.3} parent=55 // pred_check_branch
          %1194 = sbr.rel (%p1192) target = $region60
        $region59: #{snet_cifar_forward.3} parent=55 // pred_region
          %s1195 = sand.u32 %s182, 1
          %s1196 = scalar_lea.sflag [#allocation3], %s1195
          %s1197 = sand.u32 %s182, 1
          %s1198 = scalar_lea.vmem [#allocation2], %s1197
          %1199 = dma.done %s1196, 16
        $region60: #{snet_cifar_forward.3} parent=55 // pred_fallthru
          _
      $region56: #{snet_cifar_forward.3} parent=5 // pred_fallthru
        _
    $region6: #{snet_cifar_forward.3} parent=1 // loop_footer
      %s20 = sadd.s32 1, %s16
    $region7: #{snet_cifar_forward.3} parent=1 // loop_footer_branch
      %15 = sbr.rel target = $region3
    $region8: #{snet_cifar_forward.3} parent=1 // loop_exit
      _
    %1200 = vsyncpa [#allocation3], 1
    %s1201 = scalar_lea.sflag [#allocation3], 1
    %1202 = vsyncpa %s1201, 1

</llo_original>
